<compile_context>
chip_gen: v6e
topology: v6e:2x2x1
jax: 0.10.0
libtpu: 0.0.40
codegen_flags: <defaults>
</compile_context>

<pallas_src>
import jax
import jax.numpy as jnp
from jax.experimental import pallas as pl
from jax.experimental.pallas import tpu as pltpu

# ---- synthetic BERT config (small, but semantically faithful) ----
VOCAB = 100    # vocab size of synthetic embedding table
VPAD = 128     # vocab rows padded to one full lane tile
B = 2          # batch
S = 8          # sequence length
H = 32         # bert_model.config.hidden_size
FF = 64        # intermediate (4*H)
C = 8          # num_classes
N = B * S      # folded token count
CPAD = 128     # lane-dense padding for all small RHS / output lane dims
NSLAB = 5      # number of 128-lane blocks in the weight super-slab

# rows of the packed (16, 128) bias / LayerNorm-parameter slab (rows 12..15 unused pad)
(_LN0_G, _LN0_B, _B_QKV, _B_O, _LN1_G, _LN1_B,
 _B_FF1, _B_FF2, _LN2_G, _LN2_B, _B_P, _B_C) = range(12)


def intent_kernel(ids_ref, mask_ref, wemb_ref, pos_ref, wslab_ref, wff2_ref,
                  vec_ref, out_ref):
    # ---- fused embedding lookup: one-hot @ padded table (exact; toy vocab) ----
    ids = ids_ref[...]                                               # (N, 1) int32
    onehot = (jax.lax.broadcasted_iota(jnp.int32, (N, VPAD), 1) == ids).astype(jnp.float32)
    x = jnp.dot(onehot, wemb_ref[...], preferred_element_type=jnp.float32)   # (N, H)
    x = x + pos_ref[...]                                             # pre-tiled (N, H)

    def vec(row):                                                    # full 128-lane bias row
        return vec_ref[row:row + 1, :]
    def vec_h(row):                                                  # H-lane LN param row
        return vec_ref[row:row + 1, :H]

    def layer_norm(v, g, b):
        mu = jnp.mean(v, axis=-1, keepdims=True)
        var = jnp.mean((v - mu) ** 2, axis=-1, keepdims=True)
        return (v - mu) * jax.lax.rsqrt(var + 1e-12) * g + b

    # static 128-boundary slices of the weight super-slab (views, no copies)
    w_qkv = wslab_ref[:, 0 * CPAD:1 * CPAD]    # (H,128)  Q third pre-scaled by 1/sqrt(H)
    w_o   = wslab_ref[:, 1 * CPAD:2 * CPAD]    # (H,128)
    w_ff1 = wslab_ref[:, 2 * CPAD:3 * CPAD]    # (H,128)
    w_p   = wslab_ref[:, 3 * CPAD:4 * CPAD]    # (H,128)
    w_c   = wslab_ref[:, 4 * CPAD:5 * CPAD]    # (H,128)

    # embedding layernorm
    h = layer_norm(x, vec_h(_LN0_G), vec_h(_LN0_B))                  # (N, H)

    # ---- self-attention (single head, head_dim == H), fused lane-dense QKV ----
    qkv = jnp.dot(h, w_qkv, preferred_element_type=jnp.float32) + vec(_B_QKV)   # (N, 128)
    q = qkv[:, 0 * H:1 * H].reshape(B, S, H)                         # already scaled
    k = qkv[:, 1 * H:2 * H].reshape(B, S, H)
    v = qkv[:, 2 * H:3 * H].reshape(B, S, H)

    scores = jax.lax.dot_general(                                    # (B, S, S)
        q, k, dimension_numbers=(((2,), (2,)), ((0,), (0,))),
        preferred_element_type=jnp.float32)
    scores = scores + (1.0 - mask_ref[...]) * (-1e9)                 # additive key mask
    scores = scores - jnp.max(scores, axis=-1, keepdims=True)
    p = jnp.exp(scores)
    p = p * pl.reciprocal(jnp.sum(p, axis=-1, keepdims=True), approx=True)
    ctx = jax.lax.dot_general(                                       # (B, S, H)
        p, v, dimension_numbers=(((2,), (1,)), ((0,), (0,))),
        preferred_element_type=jnp.float32).reshape(N, H)

    attn = jnp.dot(ctx, w_o, preferred_element_type=jnp.float32) + vec(_B_O)    # (N, 128)
    h1 = layer_norm(h + attn[:, :H], vec_h(_LN1_G), vec_h(_LN1_B))

    # ---- feed-forward (lane-dense 128-wide intermediates) ----
    ff = jnp.dot(h1, w_ff1, preferred_element_type=jnp.float32) + vec(_B_FF1)   # (N, 128)
    ff = jax.nn.gelu(ff, approximate=True)                           # gelu(0)=0 on pad lanes
    ff = jnp.dot(ff, wff2_ref[...], preferred_element_type=jnp.float32) + vec(_B_FF2)
    h2 = layer_norm(h1 + ff[:, :H], vec_h(_LN2_G), vec_h(_LN2_B))    # (N, H)

    # ---- BERT pooler on ALL token rows (CLS rows selected in wrapper) ----
    pooled = jnp.tanh(
        jnp.dot(h2, w_p, preferred_element_type=jnp.float32) + vec(_B_P))       # (N, 128)

    # nn.Dropout(0.1): identity at inference (eval mode).

    # ---- classifier: nn.Linear(H, num_classes), lane-dense padded to 128 ----
    logits = jnp.dot(pooled[:, :H], w_c, preferred_element_type=jnp.float32) + vec(_B_C)
    out_ref[...] = logits                                            # (N, 128) full-tile stores


def intent_forward(input_ids, attention_mask, params, emb):
    """input_ids (B,S) int32, attention_mask (B,S) -> logits (B, C) f32."""
    ids2d = input_ids.reshape(N, 1).astype(jnp.int32)
    mask3 = attention_mask.reshape(B, 1, S).astype(jnp.float32)

    # --- pack weights (done once per call; would be pre-packed in deployment) ---
    scale = 1.0 / (H ** 0.5)
    wq_s = params["wq"] * scale                       # fold attention scale into Q
    bq_s = params["bq"] * scale

    def pad_lanes(w, cols=CPAD):
        out = jnp.zeros((w.shape[0], cols), jnp.float32)
        return out.at[:, :w.shape[1]].set(w.astype(jnp.float32))

    wslab = jnp.concatenate([                                         # (H, 5*128)
        pad_lanes(jnp.concatenate([wq_s, params["wk"], params["wv"]], axis=1)),  # QKV
        pad_lanes(params["wo"]),
        pad_lanes(params["w1"]),
        pad_lanes(params["wp"]),
        pad_lanes(params["wc"]),
    ], axis=1)

    wff2_pad = jnp.zeros((CPAD, CPAD), jnp.float32).at[:FF, :H].set(params["w2"])
    wemb_pad = jnp.zeros((VPAD, H), jnp.float32).at[:VOCAB, :].set(emb["word"])
    pos_tiled = jnp.tile(emb["pos"].astype(jnp.float32), (B, 1))      # (N, H)

    b_qkv = jnp.concatenate([bq_s, params["bk"], params["bv"]], axis=1)
    vec_rows = [params["ln0_g"], params["ln0_b"], b_qkv, params["bo"],
                params["ln1_g"], params["ln1_b"], params["b1"], params["b2"],
                params["ln2_g"], params["ln2_b"], params["bp"], params["bc"]]
    vec_slab = jnp.zeros((16, CPAD), jnp.float32)                     # padded to 2 sublane tiles
    for i, r in enumerate(vec_rows):
        r = r.reshape(-1).astype(jnp.float32)
        vec_slab = vec_slab.at[i, :r.shape[0]].set(r)

    vmem_spec = pl.BlockSpec(memory_space=pltpu.MemorySpace.VMEM)
    out = pl.pallas_call(
        intent_kernel,
        out_shape=jax.ShapeDtypeStruct((N, CPAD), jnp.float32),
        in_specs=[vmem_spec] * 7,
        out_specs=vmem_spec,
    )(ids2d, mask3, wemb_pad, pos_tiled, wslab, wff2_pad, vec_slab)

    # pooler/classifier were applied per token row; CLS rows sit at b*S.
    return out.reshape(B, S, CPAD)[:, 0, :C]


def init_params(key):
    ks = jax.random.split(key, 12)
    nrm = lambda k, s: (0.02 * jax.random.normal(k, s)).astype(jnp.float32)
    p = {
        "ln0_g": jnp.ones((1, H), jnp.float32), "ln0_b": jnp.zeros((1, H), jnp.float32),
        "wq": nrm(ks[0], (H, H)), "bq": jnp.zeros((1, H), jnp.float32),
        "wk": nrm(ks[1], (H, H)), "bk": jnp.zeros((1, H), jnp.float32),
        "wv": nrm(ks[2], (H, H)), "bv": jnp.zeros((1, H), jnp.float32),
        "wo": nrm(ks[3], (H, H)), "bo": jnp.zeros((1, H), jnp.float32),
        "ln1_g": jnp.ones((1, H), jnp.float32), "ln1_b": jnp.zeros((1, H), jnp.float32),
        "w1": nrm(ks[4], (H, FF)), "b1": jnp.zeros((1, FF), jnp.float32),
        "w2": nrm(ks[5], (FF, H)), "b2": jnp.zeros((1, H), jnp.float32),
        "ln2_g": jnp.ones((1, H), jnp.float32), "ln2_b": jnp.zeros((1, H), jnp.float32),
        "wp": nrm(ks[6], (H, H)), "bp": nrm(ks[7], (1, H)),
        "wc": nrm(ks[8], (H, C)), "bc": nrm(ks[9], (1, C)),
    }
    emb = {
        "word": nrm(ks[10], (VOCAB, H)),
        "pos": nrm(ks[11], (S, H)),
    }
    return p, emb


def ref_forward(input_ids, attention_mask, p, emb):
    """Pure-JAX reference mirroring the kernel math."""
    x_emb = emb["word"][input_ids] + emb["pos"][None, :, :]           # (B, S, H)
    mask3 = attention_mask.reshape(B, 1, S).astype(jnp.float32)

    def ln(v, g, b):
        mu = v.mean(-1, keepdims=True)
        var = ((v - mu) ** 2).mean(-1, keepdims=True)
        return (v - mu) * jax.lax.rsqrt(var + 1e-12) * g + b

    def one(x, m):
        h = ln(x, p["ln0_g"], p["ln0_b"])
        q = h @ p["wq"] + p["bq"]
        k = h @ p["wk"] + p["bk"]
        v = h @ p["wv"] + p["bv"]
        s = (q @ k.T) / (H ** 0.5) + (1.0 - m) * (-1e9)
        a = jax.nn.softmax(s, axis=-1)
        h1 = ln(h + a @ v @ p["wo"] + p["bo"], p["ln1_g"], p["ln1_b"])
        ff = jax.nn.gelu(h1 @ p["w1"] + p["b1"], approximate=True) @ p["w2"] + p["b2"]
        h2 = ln(h1 + ff, p["ln2_g"], p["ln2_b"])
        pooled = jnp.tanh(h2[0:1] @ p["wp"] + p["bp"])
        return (pooled @ p["wc"] + p["bc"])[0]

    return jax.vmap(one)(x_emb, mask3)


if __name__ == "__main__":
    key = jax.random.PRNGKey(0)
    kp, kid = jax.random.split(key)
    params, emb = init_params(kp)

    # forward(input_ids, attention_mask)
    input_ids = jax.random.randint(kid, (B, S), 0, VOCAB)                  # (B, S) int32
    attention_mask = jnp.ones((B, S), jnp.float32).at[1, S - 2:].set(0.0)  # pad last 2 tokens of ex. 1

    logits = intent_forward(input_ids, attention_mask, params, emb)
    jax.block_until_ready(logits)

    ref = ref_forward(input_ids, attention_mask, params, emb)
    assert logits.shape == (B, C)
    assert jnp.allclose(logits, ref, atol=2e-3, rtol=1e-2), (logits, ref)
    print("KERNEL_OK")
</pallas_src>

<mosaic_0001>
module attributes {stable_mosaic.version = 11 : i64} {
  func.func @intent_kernel(%arg0: memref<16x1xi32, #tpu.memory_space<vmem>>, %arg1: memref<2x1x8xf32, #tpu.memory_space<vmem>>, %arg2: memref<128x32xf32, #tpu.memory_space<vmem>>, %arg3: memref<16x32xf32, #tpu.memory_space<vmem>>, %arg4: memref<32x640xf32, #tpu.memory_space<vmem>>, %arg5: memref<128x128xf32, #tpu.memory_space<vmem>>, %arg6: memref<16x128xf32, #tpu.memory_space<vmem>>, %arg7: memref<16x128xf32, #tpu.memory_space<vmem>>) attributes {dimension_semantics = [], scalar_prefetch = 0 : i64, scratch_operands = 0 : i64, tpu.core_type = #tpu.core_type<tc>} {
    %c0 = arith.constant 0 : index
    %c0_0 = arith.constant 0 : index
    %0 = vector.load %arg0[%c0, %c0_0] : memref<16x1xi32, #tpu.memory_space<vmem>>, vector<16x1xi32>
    %1 = tpu.iota {dimensions = array<i32: 1>} : vector<16x128xi32>
    %2 = vector.broadcast %0 : vector<16x1xi32> to vector<16x128xi32>
    %3 = arith.cmpi eq, %1, %2 : vector<16x128xi32>
    %4 = arith.extui %3 : vector<16x128xi1> to vector<16x128xi32>
    %5 = arith.sitofp %4 : vector<16x128xi32> to vector<16x128xf32>
    %c0_1 = arith.constant 0 : index
    %c0_2 = arith.constant 0 : index
    %6 = vector.load %arg2[%c0_1, %c0_2] : memref<128x32xf32, #tpu.memory_space<vmem>>, vector<128x32xf32>
    %cst = arith.constant dense<0.000000e+00> : vector<16x32xf32>
    %7 = tpu.matmul %5, %6, %cst {dimension_numbers = #tpu.dot_dimension_numbers<[1], [0], [0], [1], [0, 0, 1, 1], [], []>} : vector<16x128xf32>, vector<128x32xf32>, vector<16x32xf32> -> vector<16x32xf32>
    %c0_3 = arith.constant 0 : index
    %c0_4 = arith.constant 0 : index
    %8 = vector.load %arg3[%c0_3, %c0_4] : memref<16x32xf32, #tpu.memory_space<vmem>>, vector<16x32xf32>
    %9 = arith.addf %7, %8 : vector<16x32xf32>
    %c0_5 = arith.constant 0 : index
    %c0_6 = arith.constant 0 : index
    %10 = vector.load %arg4[%c0_5, %c0_6] : memref<32x640xf32, #tpu.memory_space<vmem>>, vector<32x128xf32>
    %c0_7 = arith.constant 0 : index
    %c128 = arith.constant 128 : index
    %11 = vector.load %arg4[%c0_7, %c128] : memref<32x640xf32, #tpu.memory_space<vmem>>, vector<32x128xf32>
    %c0_8 = arith.constant 0 : index
    %c256 = arith.constant 256 : index
    %12 = vector.load %arg4[%c0_8, %c256] : memref<32x640xf32, #tpu.memory_space<vmem>>, vector<32x128xf32>
    %c0_9 = arith.constant 0 : index
    %c384 = arith.constant 384 : index
    %13 = vector.load %arg4[%c0_9, %c384] : memref<32x640xf32, #tpu.memory_space<vmem>>, vector<32x128xf32>
    %c0_10 = arith.constant 0 : index
    %c512 = arith.constant 512 : index
    %14 = vector.load %arg4[%c0_10, %c512] : memref<32x640xf32, #tpu.memory_space<vmem>>, vector<32x128xf32>
    %c0_11 = arith.constant 0 : index
    %c0_12 = arith.constant 0 : index
    %15 = vector.load %arg6[%c0_11, %c0_12] : memref<16x128xf32, #tpu.memory_space<vmem>>, vector<1x32xf32>
    %c1 = arith.constant 1 : index
    %c0_13 = arith.constant 0 : index
    %16 = vector.load %arg6[%c1, %c0_13] : memref<16x128xf32, #tpu.memory_space<vmem>>, vector<1x32xf32>
    %cst_14 = arith.constant dense<0.000000e+00> : vector<16xf32>
    %17 = vector.multi_reduction <add>, %9, %cst_14 [1] : vector<16x32xf32> to vector<16xf32>
    %18 = vector.shape_cast %17 : vector<16xf32> to vector<16x1xf32>
    %cst_15 = arith.constant 3.200000e+01 : f32
    %19 = vector.broadcast %cst_15 : f32 to vector<16x1xf32>
    %20 = arith.divf %18, %19 : vector<16x1xf32>
    %21 = vector.broadcast %20 : vector<16x1xf32> to vector<16x32xf32>
    %22 = arith.subf %9, %21 : vector<16x32xf32>
    %23 = arith.mulf %22, %22 : vector<16x32xf32>
    %cst_16 = arith.constant dense<0.000000e+00> : vector<16xf32>
    %24 = vector.multi_reduction <add>, %23, %cst_16 [1] : vector<16x32xf32> to vector<16xf32>
    %25 = vector.shape_cast %24 : vector<16xf32> to vector<16x1xf32>
    %cst_17 = arith.constant 3.200000e+01 : f32
    %26 = vector.broadcast %cst_17 : f32 to vector<16x1xf32>
    %27 = arith.divf %25, %26 : vector<16x1xf32>
    %28 = vector.broadcast %20 : vector<16x1xf32> to vector<16x32xf32>
    %29 = arith.subf %9, %28 : vector<16x32xf32>
    %cst_18 = arith.constant 9.99999996E-13 : f32
    %30 = vector.broadcast %cst_18 : f32 to vector<16x1xf32>
    %31 = arith.addf %27, %30 : vector<16x1xf32>
    %32 = math.rsqrt %31 : vector<16x1xf32>
    %33 = vector.broadcast %32 : vector<16x1xf32> to vector<16x32xf32>
    %34 = arith.mulf %29, %33 : vector<16x32xf32>
    %35 = vector.broadcast %15 : vector<1x32xf32> to vector<16x32xf32>
    %36 = arith.mulf %34, %35 : vector<16x32xf32>
    %37 = vector.broadcast %16 : vector<1x32xf32> to vector<16x32xf32>
    %38 = arith.addf %36, %37 : vector<16x32xf32>
    %cst_19 = arith.constant dense<0.000000e+00> : vector<16x128xf32>
    %39 = tpu.matmul %38, %10, %cst_19 {dimension_numbers = #tpu.dot_dimension_numbers<[1], [0], [0], [1], [0, 0, 1, 1], [], []>} : vector<16x32xf32>, vector<32x128xf32>, vector<16x128xf32> -> vector<16x128xf32>
    %c2 = arith.constant 2 : index
    %c0_20 = arith.constant 0 : index
    %40 = vector.load %arg6[%c2, %c0_20] : memref<16x128xf32, #tpu.memory_space<vmem>>, vector<1x128xf32>
    %41 = vector.broadcast %40 : vector<1x128xf32> to vector<16x128xf32>
    %42 = arith.addf %39, %41 : vector<16x128xf32>
    %43 = vector.extract_strided_slice %42 {offsets = [0, 0], sizes = [16, 32], strides = [1, 1]} : vector<16x128xf32> to vector<16x32xf32>
    %44 = vector.shape_cast %43 : vector<16x32xf32> to vector<2x8x32xf32>
    %45 = vector.extract_strided_slice %42 {offsets = [0, 32], sizes = [16, 32], strides = [1, 1]} : vector<16x128xf32> to vector<16x32xf32>
    %46 = vector.shape_cast %45 : vector<16x32xf32> to vector<2x8x32xf32>
    %47 = vector.extract_strided_slice %42 {offsets = [0, 64], sizes = [16, 32], strides = [1, 1]} : vector<16x128xf32> to vector<16x32xf32>
    %48 = vector.shape_cast %47 : vector<16x32xf32> to vector<2x8x32xf32>
    %cst_21 = arith.constant dense<0.000000e+00> : vector<2x8x8xf32>
    %49 = tpu.matmul %44, %46, %cst_21 {dimension_numbers = #tpu.dot_dimension_numbers<[2], [2], [1], [1], [0, 0, 0, 1, 1, 1], [0], [0]>} : vector<2x8x32xf32>, vector<2x8x32xf32>, vector<2x8x8xf32> -> vector<2x8x8xf32>
    %c0_22 = arith.constant 0 : index
    %c0_23 = arith.constant 0 : index
    %c0_24 = arith.constant 0 : index
    %50 = vector.load %arg1[%c0_22, %c0_23, %c0_24] : memref<2x1x8xf32, #tpu.memory_space<vmem>>, vector<2x1x8xf32>
    %cst_25 = arith.constant 1.000000e+00 : f32
    %51 = vector.broadcast %cst_25 : f32 to vector<2x1x8xf32>
    %52 = arith.subf %51, %50 : vector<2x1x8xf32>
    %cst_26 = arith.constant -1.000000e+09 : f32
    %53 = vector.broadcast %cst_26 : f32 to vector<2x1x8xf32>
    %54 = arith.mulf %52, %53 : vector<2x1x8xf32>
    %55 = vector.broadcast %54 : vector<2x1x8xf32> to vector<2x8x8xf32>
    %56 = arith.addf %49, %55 : vector<2x8x8xf32>
    %cst_27 = arith.constant dense<0xFF800000> : vector<2x8xf32>
    %57 = vector.multi_reduction <maximumf>, %56, %cst_27 [2] : vector<2x8x8xf32> to vector<2x8xf32>
    %58 = vector.shape_cast %57 : vector<2x8xf32> to vector<2x8x1xf32>
    %59 = vector.broadcast %58 : vector<2x8x1xf32> to vector<2x8x8xf32>
    %60 = arith.subf %56, %59 : vector<2x8x8xf32>
    %61 = math.exp %60 : vector<2x8x8xf32>
    %cst_28 = arith.constant dense<0.000000e+00> : vector<2x8xf32>
    %62 = vector.multi_reduction <add>, %61, %cst_28 [2] : vector<2x8x8xf32> to vector<2x8xf32>
    %63 = vector.shape_cast %62 : vector<2x8xf32> to vector<2x8x1xf32>
    %64 = tpu.reciprocal %63 {approx = true} : vector<2x8x1xf32> -> vector<2x8x1xf32>
    %65 = vector.broadcast %64 : vector<2x8x1xf32> to vector<2x8x8xf32>
    %66 = arith.mulf %61, %65 : vector<2x8x8xf32>
    %cst_29 = arith.constant dense<0.000000e+00> : vector<2x8x32xf32>
    %67 = tpu.matmul %66, %48, %cst_29 {dimension_numbers = #tpu.dot_dimension_numbers<[2], [1], [1], [2], [0, 0, 0, 1, 1, 2], [0], [0]>} : vector<2x8x8xf32>, vector<2x8x32xf32>, vector<2x8x32xf32> -> vector<2x8x32xf32>
    %68 = vector.shape_cast %67 : vector<2x8x32xf32> to vector<16x32xf32>
    %cst_30 = arith.constant dense<0.000000e+00> : vector<16x128xf32>
    %69 = tpu.matmul %68, %11, %cst_30 {dimension_numbers = #tpu.dot_dimension_numbers<[1], [0], [0], [1], [0, 0, 1, 1], [], []>} : vector<16x32xf32>, vector<32x128xf32>, vector<16x128xf32> -> vector<16x128xf32>
    %c3 = arith.constant 3 : index
    %c0_31 = arith.constant 0 : index
    %70 = vector.load %arg6[%c3, %c0_31] : memref<16x128xf32, #tpu.memory_space<vmem>>, vector<1x128xf32>
    %71 = vector.broadcast %70 : vector<1x128xf32> to vector<16x128xf32>
    %72 = arith.addf %69, %71 : vector<16x128xf32>
    %73 = vector.extract_strided_slice %72 {offsets = [0, 0], sizes = [16, 32], strides = [1, 1]} : vector<16x128xf32> to vector<16x32xf32>
    %74 = arith.addf %38, %73 : vector<16x32xf32>
    %c4 = arith.constant 4 : index
    %c0_32 = arith.constant 0 : index
    %75 = vector.load %arg6[%c4, %c0_32] : memref<16x128xf32, #tpu.memory_space<vmem>>, vector<1x32xf32>
    %c5 = arith.constant 5 : index
    %c0_33 = arith.constant 0 : index
    %76 = vector.load %arg6[%c5, %c0_33] : memref<16x128xf32, #tpu.memory_space<vmem>>, vector<1x32xf32>
    %cst_34 = arith.constant dense<0.000000e+00> : vector<16xf32>
    %77 = vector.multi_reduction <add>, %74, %cst_34 [1] : vector<16x32xf32> to vector<16xf32>
    %78 = vector.shape_cast %77 : vector<16xf32> to vector<16x1xf32>
    %cst_35 = arith.constant 3.200000e+01 : f32
    %79 = vector.broadcast %cst_35 : f32 to vector<16x1xf32>
    %80 = arith.divf %78, %79 : vector<16x1xf32>
    %81 = vector.broadcast %80 : vector<16x1xf32> to vector<16x32xf32>
    %82 = arith.subf %74, %81 : vector<16x32xf32>
    %83 = arith.mulf %82, %82 : vector<16x32xf32>
    %cst_36 = arith.constant dense<0.000000e+00> : vector<16xf32>
    %84 = vector.multi_reduction <add>, %83, %cst_36 [1] : vector<16x32xf32> to vector<16xf32>
    %85 = vector.shape_cast %84 : vector<16xf32> to vector<16x1xf32>
    %cst_37 = arith.constant 3.200000e+01 : f32
    %86 = vector.broadcast %cst_37 : f32 to vector<16x1xf32>
    %87 = arith.divf %85, %86 : vector<16x1xf32>
    %88 = vector.broadcast %80 : vector<16x1xf32> to vector<16x32xf32>
    %89 = arith.subf %74, %88 : vector<16x32xf32>
    %cst_38 = arith.constant 9.99999996E-13 : f32
    %90 = vector.broadcast %cst_38 : f32 to vector<16x1xf32>
    %91 = arith.addf %87, %90 : vector<16x1xf32>
    %92 = math.rsqrt %91 : vector<16x1xf32>
    %93 = vector.broadcast %92 : vector<16x1xf32> to vector<16x32xf32>
    %94 = arith.mulf %89, %93 : vector<16x32xf32>
    %95 = vector.broadcast %75 : vector<1x32xf32> to vector<16x32xf32>
    %96 = arith.mulf %94, %95 : vector<16x32xf32>
    %97 = vector.broadcast %76 : vector<1x32xf32> to vector<16x32xf32>
    %98 = arith.addf %96, %97 : vector<16x32xf32>
    %cst_39 = arith.constant dense<0.000000e+00> : vector<16x128xf32>
    %99 = tpu.matmul %98, %12, %cst_39 {dimension_numbers = #tpu.dot_dimension_numbers<[1], [0], [0], [1], [0, 0, 1, 1], [], []>} : vector<16x32xf32>, vector<32x128xf32>, vector<16x128xf32> -> vector<16x128xf32>
    %c6 = arith.constant 6 : index
    %c0_40 = arith.constant 0 : index
    %100 = vector.load %arg6[%c6, %c0_40] : memref<16x128xf32, #tpu.memory_space<vmem>>, vector<1x128xf32>
    %101 = vector.broadcast %100 : vector<1x128xf32> to vector<16x128xf32>
    %102 = arith.addf %99, %101 : vector<16x128xf32>
    %103 = arith.mulf %102, %102 : vector<16x128xf32>
    %104 = arith.mulf %102, %103 : vector<16x128xf32>
    %cst_41 = arith.constant 4.471500e-02 : f32
    %105 = vector.broadcast %cst_41 : f32 to vector<16x128xf32>
    %106 = arith.mulf %105, %104 : vector<16x128xf32>
    %107 = arith.addf %102, %106 : vector<16x128xf32>
    %cst_42 = arith.constant 0.797884583 : f32
    %108 = vector.broadcast %cst_42 : f32 to vector<16x128xf32>
    %109 = arith.mulf %108, %107 : vector<16x128xf32>
    %110 = math.tanh %109 : vector<16x128xf32>
    %cst_43 = arith.constant 1.000000e+00 : f32
    %111 = vector.broadcast %cst_43 : f32 to vector<16x128xf32>
    %112 = arith.addf %111, %110 : vector<16x128xf32>
    %cst_44 = arith.constant 5.000000e-01 : f32
    %113 = vector.broadcast %cst_44 : f32 to vector<16x128xf32>
    %114 = arith.mulf %113, %112 : vector<16x128xf32>
    %115 = arith.mulf %102, %114 : vector<16x128xf32>
    %c0_45 = arith.constant 0 : index
    %c0_46 = arith.constant 0 : index
    %116 = vector.load %arg5[%c0_45, %c0_46] : memref<128x128xf32, #tpu.memory_space<vmem>>, vector<128x128xf32>
    %cst_47 = arith.constant dense<0.000000e+00> : vector<16x128xf32>
    %117 = tpu.matmul %115, %116, %cst_47 {dimension_numbers = #tpu.dot_dimension_numbers<[1], [0], [0], [1], [0, 0, 1, 1], [], []>} : vector<16x128xf32>, vector<128x128xf32>, vector<16x128xf32> -> vector<16x128xf32>
    %c7 = arith.constant 7 : index
    %c0_48 = arith.constant 0 : index
    %118 = vector.load %arg6[%c7, %c0_48] : memref<16x128xf32, #tpu.memory_space<vmem>>, vector<1x128xf32>
    %119 = vector.broadcast %118 : vector<1x128xf32> to vector<16x128xf32>
    %120 = arith.addf %117, %119 : vector<16x128xf32>
    %121 = vector.extract_strided_slice %120 {offsets = [0, 0], sizes = [16, 32], strides = [1, 1]} : vector<16x128xf32> to vector<16x32xf32>
    %122 = arith.addf %98, %121 : vector<16x32xf32>
    %c8 = arith.constant 8 : index
    %c0_49 = arith.constant 0 : index
    %123 = vector.load %arg6[%c8, %c0_49] : memref<16x128xf32, #tpu.memory_space<vmem>>, vector<1x32xf32>
    %c9 = arith.constant 9 : index
    %c0_50 = arith.constant 0 : index
    %124 = vector.load %arg6[%c9, %c0_50] : memref<16x128xf32, #tpu.memory_space<vmem>>, vector<1x32xf32>
    %cst_51 = arith.constant dense<0.000000e+00> : vector<16xf32>
    %125 = vector.multi_reduction <add>, %122, %cst_51 [1] : vector<16x32xf32> to vector<16xf32>
    %126 = vector.shape_cast %125 : vector<16xf32> to vector<16x1xf32>
    %cst_52 = arith.constant 3.200000e+01 : f32
    %127 = vector.broadcast %cst_52 : f32 to vector<16x1xf32>
    %128 = arith.divf %126, %127 : vector<16x1xf32>
    %129 = vector.broadcast %128 : vector<16x1xf32> to vector<16x32xf32>
    %130 = arith.subf %122, %129 : vector<16x32xf32>
    %131 = arith.mulf %130, %130 : vector<16x32xf32>
    %cst_53 = arith.constant dense<0.000000e+00> : vector<16xf32>
    %132 = vector.multi_reduction <add>, %131, %cst_53 [1] : vector<16x32xf32> to vector<16xf32>
    %133 = vector.shape_cast %132 : vector<16xf32> to vector<16x1xf32>
    %cst_54 = arith.constant 3.200000e+01 : f32
    %134 = vector.broadcast %cst_54 : f32 to vector<16x1xf32>
    %135 = arith.divf %133, %134 : vector<16x1xf32>
    %136 = vector.broadcast %128 : vector<16x1xf32> to vector<16x32xf32>
    %137 = arith.subf %122, %136 : vector<16x32xf32>
    %cst_55 = arith.constant 9.99999996E-13 : f32
    %138 = vector.broadcast %cst_55 : f32 to vector<16x1xf32>
    %139 = arith.addf %135, %138 : vector<16x1xf32>
    %140 = math.rsqrt %139 : vector<16x1xf32>
    %141 = vector.broadcast %140 : vector<16x1xf32> to vector<16x32xf32>
    %142 = arith.mulf %137, %141 : vector<16x32xf32>
    %143 = vector.broadcast %123 : vector<1x32xf32> to vector<16x32xf32>
    %144 = arith.mulf %142, %143 : vector<16x32xf32>
    %145 = vector.broadcast %124 : vector<1x32xf32> to vector<16x32xf32>
    %146 = arith.addf %144, %145 : vector<16x32xf32>
    %cst_56 = arith.constant dense<0.000000e+00> : vector<16x128xf32>
    %147 = tpu.matmul %146, %13, %cst_56 {dimension_numbers = #tpu.dot_dimension_numbers<[1], [0], [0], [1], [0, 0, 1, 1], [], []>} : vector<16x32xf32>, vector<32x128xf32>, vector<16x128xf32> -> vector<16x128xf32>
    %c10 = arith.constant 10 : index
    %c0_57 = arith.constant 0 : index
    %148 = vector.load %arg6[%c10, %c0_57] : memref<16x128xf32, #tpu.memory_space<vmem>>, vector<1x128xf32>
    %149 = vector.broadcast %148 : vector<1x128xf32> to vector<16x128xf32>
    %150 = arith.addf %147, %149 : vector<16x128xf32>
    %151 = math.tanh %150 : vector<16x128xf32>
    %152 = vector.extract_strided_slice %151 {offsets = [0, 0], sizes = [16, 32], strides = [1, 1]} : vector<16x128xf32> to vector<16x32xf32>
    %cst_58 = arith.constant dense<0.000000e+00> : vector<16x128xf32>
    %153 = tpu.matmul %152, %14, %cst_58 {dimension_numbers = #tpu.dot_dimension_numbers<[1], [0], [0], [1], [0, 0, 1, 1], [], []>} : vector<16x32xf32>, vector<32x128xf32>, vector<16x128xf32> -> vector<16x128xf32>
    %c11 = arith.constant 11 : index
    %c0_59 = arith.constant 0 : index
    %154 = vector.load %arg6[%c11, %c0_59] : memref<16x128xf32, #tpu.memory_space<vmem>>, vector<1x128xf32>
    %155 = vector.broadcast %154 : vector<1x128xf32> to vector<16x128xf32>
    %156 = arith.addf %153, %155 : vector<16x128xf32>
    %c0_60 = arith.constant 0 : index
    %c0_61 = arith.constant 0 : index
    %157 = vector.load %arg7[%c0_60, %c0_61] : memref<16x128xf32, #tpu.memory_space<vmem>>, vector<16x128xf32>
    tpu.vector_store %arg7[%c0_60, %c0_61], %156 {strides = array<i32>} : memref<16x128xf32, #tpu.memory_space<vmem>>, vector<16x128xf32>,
    return
  }
}

</mosaic_0001>

<llo_original>
// kernel: tpu_custom_call.1
$region0: #{tpu_custom_call.1}
  #allocation0 [shape = 'u32[]', space=smem, size = 0x4, offset = 0x4, fixed_abs, tag = 'smem constant byte address 0x4 - core index']
  #allocation1 [shape = 'u32[144,128]{1,0:T(1,128)}', space=vmem, size = 0x12000, scoped, tag = 'internal scratch']
  %s0 = inlined_call_operand.vmem [shape: s32[16,1], index: 0, kind: input, shape index: {}]
  %s1 = inlined_call_operand.vmem [shape: f32[2,1,8], index: 1, kind: input, shape index: {}]
  %s2 = inlined_call_operand.vmem [shape: f32[128,32], index: 2, kind: input, shape index: {}]
  %s3 = inlined_call_operand.vmem [shape: f32[16,32], index: 3, kind: input, shape index: {}]
  %s4 = inlined_call_operand.vmem [shape: f32[32,640], index: 4, kind: input, shape index: {}]
  %s5 = inlined_call_operand.hbm [shape: f32[128,128], index: 5, kind: input, shape index: {}]
  %s6 = inlined_call_operand.hbm [shape: f32[16,128], index: 6, kind: input, shape index: {}]
  %s7 = inlined_call_operand.hbm [shape: f32[16,128], index: 7, kind: output, shape index: {}]
  %s8 = sld [smem:[#allocation0]]
  $region46: #{tpu_custom_call.1} parent=0
    _
  %s10 = ssub.s32 1, %s8
  %s11 = scalar_select 0, %s10, %s8
  $region1: #{tpu_custom_call.1} parent=0
    #allocation2 [shape = 'u8[65536]{0}', space=vmem, size = 0x10000, scoped, tag = 'input window, operand 5, single buffered']
    #allocation3 [shape = 's32[1]{0}', space=sflag, size = 0x4, scoped, tag = 'scoped memory for tpu_custom_call.1']
    #allocation4 [shape = 's32[1]{0}', space=sflag, size = 0x4, scoped, tag = 'scoped memory for tpu_custom_call.1']
    #allocation5 [shape = 'u8[8192]{0}', space=vmem, size = 0x2000, scoped, tag = 'input window, operand 6, single buffered']
    #allocation6 [shape = 's32[1]{0}', space=sflag, size = 0x4, scoped, tag = 'scoped memory for tpu_custom_call.1']
    #allocation7 [shape = 'u8[8192]{0}', space=vmem, size = 0x2000, scoped, tag = 'output window, operand 0, single buffered']
    %12 = vsyncpa [#allocation3], 0
    %13 = vsyncpa [#allocation6], 0
    %14 = vsyncpa [#allocation4], 0
    // Predicated region
    $region2: #{tpu_custom_call.1} parent=1 // pred_check
      _
    $region3: #{tpu_custom_call.1} parent=1 // pred_check_branch
      %16 = sbr.rel (0) target = $region5
    $region4: #{tpu_custom_call.1} parent=1 // pred_region
      _
    $region5: #{tpu_custom_call.1} parent=1 // pred_fallthru
      _
    // Predicated region
    $region6: #{tpu_custom_call.1} parent=1 // pred_check
      _
    $region7: #{tpu_custom_call.1} parent=1 // pred_check_branch
      %18 = sbr.rel (0) target = $region9
    $region8: #{tpu_custom_call.1} parent=1 // pred_region
      _
    $region9: #{tpu_custom_call.1} parent=1 // pred_fallthru
      _
    // Predicated region
    $region10: #{tpu_custom_call.1} parent=1 // pred_check
      _
    $region11: #{tpu_custom_call.1} parent=1 // pred_check_branch
      %20 = sbr.rel (0) target = $region13
    $region12: #{tpu_custom_call.1} parent=1 // pred_region
      _
    $region13: #{tpu_custom_call.1} parent=1 // pred_fallthru
      _
    // Predicated region
    $region14: #{tpu_custom_call.1} parent=1 // pred_check
      _
    $region15: #{tpu_custom_call.1} parent=1 // pred_check_branch
      %22 = sbr.rel (0) target = $region17
    $region16: #{tpu_custom_call.1} parent=1 // pred_region
      _
    $region17: #{tpu_custom_call.1} parent=1 // pred_fallthru
      _
    // Predicated region
    $region18: #{tpu_custom_call.1} parent=1 // pred_check
      _
    $region19: #{tpu_custom_call.1} parent=1 // pred_check_branch
      %24 = sbr.rel (0) target = $region21
    $region20: #{tpu_custom_call.1} parent=1 // pred_region
      _
    $region21: #{tpu_custom_call.1} parent=1 // pred_fallthru
      _
    // Predicated region
    $region22: #{tpu_custom_call.1} parent=1 // pred_check
      _
    $region23: #{tpu_custom_call.1} parent=1 // pred_check_branch
      %26 = sbr.rel (0) target = $region25
    $region24: #{tpu_custom_call.1} parent=1 // pred_region
      %s28 = ssub.s32 2048, 2048
      %29 = vsyncadd [#allocation3], %s28
      %s30 = sshll.u32 [#allocation2], 4
      %s31 = int_to_ptr.vmem [resolvable:$true] %s30
      %36 = dma.hbm_to_vmem [thread:$0]  %s5, 2048, %s31, [#allocation3], 128, 128, 8
    $region25: #{tpu_custom_call.1} parent=1 // pred_fallthru
      _
    // Predicated region
    $region26: #{tpu_custom_call.1} parent=1 // pred_check
      _
    $region27: #{tpu_custom_call.1} parent=1 // pred_check_branch
      %38 = sbr.rel (0) target = $region29
    $region28: #{tpu_custom_call.1} parent=1 // pred_region
      %s40 = ssub.s32 256, 256
      %41 = vsyncadd [#allocation6], %s40
      %s42 = sshll.u32 [#allocation5], 4
      %s43 = int_to_ptr.vmem [resolvable:$true] %s42
      %48 = dma.hbm_to_vmem [thread:$0]  %s6, 256, %s43, [#allocation6], 128, 128, 8
    $region29: #{tpu_custom_call.1} parent=1 // pred_fallthru
      _
    // Predicated region
    $region30: #{tpu_custom_call.1} parent=1 // pred_check
      _
    $region31: #{tpu_custom_call.1} parent=1 // pred_check_branch
      %50 = sbr.rel (0) target = $region33
    $region32: #{tpu_custom_call.1} parent=1 // pred_region
      %51 = dma.done [#allocation3], 2048
    $region33: #{tpu_custom_call.1} parent=1 // pred_fallthru
      _
    // Predicated region
    $region34: #{tpu_custom_call.1} parent=1 // pred_check
      _
    $region35: #{tpu_custom_call.1} parent=1 // pred_check_branch
      %53 = sbr.rel (0) target = $region37
    $region36: #{tpu_custom_call.1} parent=1 // pred_region
      %54 = dma.done [#allocation6], 256
    $region37: #{tpu_custom_call.1} parent=1 // pred_fallthru
      _
    %v55 = vld [vmem:[%s0] sm:$0xff]
    %v56 = vld [vmem:[%s0 + $0x8] sm:$0xff]
    %v57 = vlaneseq
    %v58 = vand.u32 %v57, 127
    %59 = vset.pattern.permute.xlu0 0
    %60 = vperm.xlu0 %59, %v55
    %v61 = vpop.permute.xlu0 %60
    %62 = vset.pattern.permute.xlu0 0
    %63 = vperm.xlu0 %62, %v56
    %v64 = vpop.permute.xlu0 %63
    %vm65 = vcmp.eq.s32.totalorder %v58, %v61
    %vm66 = vcmp.eq.s32.totalorder %v58, %v64
    %v67 = vsel %vm65, 1, 0
    %v68 = vsel %vm66, 1, 0
    %v69 = vcvt.s32.f32 %v67
    %v70 = vcvt.s32.f32 %v68
    %v71 = vld [vmem:[%s2] sm:$0xff]
    %v72 = vld [vmem:[%s2 + $0x8] sm:$0xff]
    %v73 = vld [vmem:[%s2 + $0x10] sm:$0xff]
    %v74 = vld [vmem:[%s2 + $0x18] sm:$0xff]
    %v75 = vld [vmem:[%s2 + $0x20] sm:$0xff]
    %v76 = vld [vmem:[%s2 + $0x28] sm:$0xff]
    %v77 = vld [vmem:[%s2 + $0x30] sm:$0xff]
    %v78 = vld [vmem:[%s2 + $0x38] sm:$0xff]
    %v79 = vld [vmem:[%s2 + $0x40] sm:$0xff]
    %v80 = vld [vmem:[%s2 + $0x48] sm:$0xff]
    %v81 = vld [vmem:[%s2 + $0x50] sm:$0xff]
    %v82 = vld [vmem:[%s2 + $0x58] sm:$0xff]
    %v83 = vld [vmem:[%s2 + $0x60] sm:$0xff]
    %v84 = vld [vmem:[%s2 + $0x68] sm:$0xff]
    %v85 = vld [vmem:[%s2 + $0x70] sm:$0xff]
    %v86 = vld [vmem:[%s2 + $0x78] sm:$0xff]
    %v87 = vld [vmem:[%s3] sm:$0xff]
    %v88 = vld [vmem:[%s3 + $0x8] sm:$0xff]
    %89 = vmatprep.subr.mxu0 0.0
    %90 = vmatpush1.msra.mxu0 %v86
    %91 = vmatprep.subr.mxu0 0.0
    %92 = vmatpush1.msra.mxu0 %v85
    %93 = vmatprep.subr.mxu0 0.0
    %94 = vmatpush1.msra.mxu0 %v84
    %95 = vmatprep.subr.mxu0 0.0
    %96 = vmatpush1.msra.mxu0 %v83
    %97 = vmatprep.subr.mxu0 0.0
    %98 = vmatpush1.msra.mxu0 %v82
    %99 = vmatprep.subr.mxu0 0.0
    %100 = vmatpush1.msra.mxu0 %v81
    %101 = vmatprep.subr.mxu0 0.0
    %102 = vmatpush1.msra.mxu0 %v80
    %103 = vmatprep.subr.mxu0 0.0
    %104 = vmatpush1.msra.mxu0 %v79
    %105 = vmatprep.subr.mxu0 0.0
    %106 = vmatpush1.msra.mxu0 %v78
    %107 = vmatprep.subr.mxu0 0.0
    %108 = vmatpush1.msra.mxu0 %v77
    %109 = vmatprep.subr.mxu0 0.0
    %110 = vmatpush1.msra.mxu0 %v76
    %111 = vmatprep.subr.mxu0 0.0
    %112 = vmatpush1.msra.mxu0 %v75
    %113 = vmatprep.subr.mxu0 0.0
    %114 = vmatpush1.msra.mxu0 %v74
    %115 = vmatprep.subr.mxu0 0.0
    %116 = vmatpush1.msra.mxu0 %v73
    %117 = vmatprep.subr.mxu0 0.0
    %118 = vmatpush1.msra.mxu0 %v72
    %119 = vmatprep.subr.mxu0 0.0
    %120 = vmatpush1.msra.mxu0 %v71
    %121 = vmatprep.subr.mxu0 0.0
    %122 = vmatpush2.msra.mxu0 0.0
    %123 = vmatprep.subr.mxu0 0.0
    %124 = vmatpush2.msra.mxu0 0.0
    %125 = vmatprep.subr.mxu0 0.0
    %126 = vmatpush2.msra.mxu0 0.0
    %127 = vmatprep.subr.mxu0 0.0
    %128 = vmatpush2.msra.mxu0 0.0
    %129 = vmatprep.subr.mxu0 0.0
    %130 = vmatpush2.msra.mxu0 0.0
    %131 = vmatprep.subr.mxu0 0.0
    %132 = vmatpush2.msra.mxu0 0.0
    %133 = vmatprep.subr.mxu0 0.0
    %134 = vmatpush2.msra.mxu0 0.0
    %135 = vmatprep.subr.mxu0 0.0
    %136 = vmatpush2.msra.mxu0 0.0
    %137 = vmatprep.subr.mxu0 0.0
    %138 = vmatpush2.msra.mxu0 0.0
    %139 = vmatprep.subr.mxu0 0.0
    %140 = vmatpush2.msra.mxu0 0.0
    %141 = vmatprep.subr.mxu0 0.0
    %142 = vmatpush2.msra.mxu0 0.0
    %143 = vmatprep.subr.mxu0 0.0
    %144 = vmatpush2.msra.mxu0 0.0
    %145 = vmatprep.subr.mxu0 0.0
    %146 = vmatpush2.msra.mxu0 0.0
    %147 = vmatprep.subr.mxu0 0.0
    %148 = vmatpush2.msra.mxu0 0.0
    %149 = vmatprep.subr.mxu0 0.0
    %150 = vmatpush2.msra.mxu0 0.0
    %151 = vmatprep.subr.mxu0 0.0
    %152 = vmatpush2.msra.mxu0 0.0
    %153 = vmatprep.mubr.f32.mxu0 0.0
    %154 = vmatmul.mubr.f32.gmra.mxu0 %v69
    %v155 = vpop.f32.mrf.mxu0
    %v156 = vadd.f32 %v87, %v155
    %v157 = vpop.f32.mrf.mxu0
    %158 = vmatprep.mubr.f32.mxu0 0.0
    %159 = vmatmul.mubr.f32.gmra.mxu0 %v70
    %v160 = vpop.f32.mrf.mxu0
    %v161 = vadd.f32 %v88, %v160
    %v162 = vpop.f32.mrf.mxu0
    %163 = vdwg.mxu0
    %v164 = vld [vmem:[%s4] sm:$0xff]
    %v165 = vld [vmem:[%s4 + $0x28] sm:$0xff]
    %v166 = vld [vmem:[%s4 + $0x50] sm:$0xff]
    %v167 = vld [vmem:[%s4 + $0x78] sm:$0xff]
    %v168 = vld [vmem:[%s4 + $0x8] sm:$0xff]
    %v169 = vld [vmem:[%s4 + $0x30] sm:$0xff]
    %v170 = vld [vmem:[%s4 + $0x58] sm:$0xff]
    %v171 = vld [vmem:[%s4 + $0x80] sm:$0xff]
    %v172 = vld [vmem:[%s4 + $0x10] sm:$0xff]
    %v173 = vld [vmem:[%s4 + $0x38] sm:$0xff]
    %v174 = vld [vmem:[%s4 + $0x60] sm:$0xff]
    %v175 = vld [vmem:[%s4 + $0x88] sm:$0xff]
    %v176 = vld [vmem:[%s4 + $0x18] sm:$0xff]
    %v177 = vld [vmem:[%s4 + $0x40] sm:$0xff]
    %v178 = vld [vmem:[%s4 + $0x68] sm:$0xff]
    %v179 = vld [vmem:[%s4 + $0x90] sm:$0xff]
    %v180 = vld [vmem:[%s4 + $0x20] sm:$0xff]
    %v181 = vld [vmem:[%s4 + $0x48] sm:$0xff]
    %v182 = vld [vmem:[%s4 + $0x70] sm:$0xff]
    %v183 = vld [vmem:[%s4 + $0x98] sm:$0xff]
    %v184 = vld [vmem:[#allocation5] sm:$0x1]
    %v185 = vld [vmem:[#allocation5 + $0x1] sm:$0x1]
    %vm186 = vcmask 261120
    %v187 = vsel %vm186, %v156, 0.0
    %188 = vadd.xlane.f32.xlu0 %v187
    %v189 = vpop.xlane.xlu0 %188
    %v190 = vsel %vm186, %v161, 0.0
    %191 = vadd.xlane.f32.xlu0 %v190
    %v192 = vpop.xlane.xlu0 %191
    %v193 = vrcp.pop 32.0
    %v194 = vmul.f32 %v189, %v193
    %v195 = vmul.f32 %v192, %v193
    %v196 = vsub.f32 %v156, %v194
    %v197 = vsub.f32 %v161, %v195
    %v198 = vmul.f32 %v196, %v196
    %v199 = vmul.f32 %v197, %v197
    %v200 = vsel %vm186, %v198, 0.0
    %201 = vadd.xlane.f32.xlu0 %v200
    %v202 = vpop.xlane.xlu0 %201
    %v203 = vsel %vm186, %v199, 0.0
    %204 = vadd.xlane.f32.xlu0 %v203
    %v205 = vpop.xlane.xlu0 %204
    %v206 = vmul.f32 %v202, %v193
    %v207 = vmul.f32 %v205, %v193
    %v208 = vadd.f32 %v206, 1e-12
    %v209 = vadd.f32 %v207, 1e-12
    %v210 = vrsqrt.pop %v208
    %v211 = vrsqrt.pop %v209
    %v212 = vmul.f32 %v196, %v210
    %v213 = vmul.f32 %v197, %v211
    %v214 = vlaneseq
    %v215 = vshrl.u32 %v214, 7
    %v216 = vsub.s32 0, %v215
    %v217 = vrot.slane %v184, %v216
    %v218 = vmul.f32 %v212, %v217
    %v219 = vmul.f32 %v213, %v217
    %v220 = vlaneseq
    %v221 = vshrl.u32 %v220, 7
    %v222 = vsub.s32 0, %v221
    %v223 = vrot.slane %v185, %v222
    %v224 = vadd.f32 %v218, %v223
    %v225 = vadd.f32 %v219, %v223
    %v226 = vld [vmem:[#allocation5 + $0x2] sm:$0x1]
    %v227 = vlaneseq
    %v228 = vshrl.u32 %v227, 7
    %v229 = vsub.s32 0, %v228
    %v230 = vrot.slane %v226, %v229
    %v232 = vsel %vm186, %v224, 0
    %v235 = vsel %vm186, %v225, 0
    %237 = vmatprep.subr.mxu0 0.0
    %238 = vmatpush1.msra.mxu0 0.0
    %239 = vmatprep.subr.mxu0 0.0
    %240 = vmatpush1.msra.mxu0 0.0
    %241 = vmatprep.subr.mxu0 0.0
    %242 = vmatpush1.msra.mxu0 0.0
    %243 = vmatprep.subr.mxu0 0.0
    %244 = vmatpush1.msra.mxu0 0.0
    %245 = vmatprep.subr.mxu0 0.0
    %246 = vmatpush1.msra.mxu0 0.0
    %247 = vmatprep.subr.mxu0 0.0
    %248 = vmatpush1.msra.mxu0 0.0
    %249 = vmatprep.subr.mxu0 0.0
    %250 = vmatpush1.msra.mxu0 0.0
    %251 = vmatprep.subr.mxu0 0.0
    %252 = vmatpush1.msra.mxu0 0.0
    %253 = vmatprep.subr.mxu0 0.0
    %254 = vmatpush1.msra.mxu0 0.0
    %255 = vmatprep.subr.mxu0 0.0
    %256 = vmatpush1.msra.mxu0 0.0
    %257 = vmatprep.subr.mxu0 0.0
    %258 = vmatpush1.msra.mxu0 0.0
    %259 = vmatprep.subr.mxu0 0.0
    %260 = vmatpush1.msra.mxu0 0.0
    %261 = vmatprep.subr.mxu0 0.0
    %262 = vmatpush1.msra.mxu0 %v167
    %263 = vmatprep.subr.mxu0 0.0
    %264 = vmatpush1.msra.mxu0 %v166
    %265 = vmatprep.subr.mxu0 0.0
    %266 = vmatpush1.msra.mxu0 %v165
    %267 = vmatprep.subr.mxu0 0.0
    %268 = vmatpush1.msra.mxu0 %v164
    %269 = vmatprep.subr.mxu0 0.0
    %270 = vmatpush2.msra.mxu0 0.0
    %271 = vmatprep.subr.mxu0 0.0
    %272 = vmatpush2.msra.mxu0 0.0
    %273 = vmatprep.subr.mxu0 0.0
    %274 = vmatpush2.msra.mxu0 0.0
    %275 = vmatprep.subr.mxu0 0.0
    %276 = vmatpush2.msra.mxu0 0.0
    %277 = vmatprep.subr.mxu0 0.0
    %278 = vmatpush2.msra.mxu0 0.0
    %279 = vmatprep.subr.mxu0 0.0
    %280 = vmatpush2.msra.mxu0 0.0
    %281 = vmatprep.subr.mxu0 0.0
    %282 = vmatpush2.msra.mxu0 0.0
    %283 = vmatprep.subr.mxu0 0.0
    %284 = vmatpush2.msra.mxu0 0.0
    %285 = vmatprep.subr.mxu0 0.0
    %286 = vmatpush2.msra.mxu0 0.0
    %287 = vmatprep.subr.mxu0 0.0
    %288 = vmatpush2.msra.mxu0 0.0
    %289 = vmatprep.subr.mxu0 0.0
    %290 = vmatpush2.msra.mxu0 0.0
    %291 = vmatprep.subr.mxu0 0.0
    %292 = vmatpush2.msra.mxu0 0.0
    %293 = vmatprep.subr.mxu0 0.0
    %294 = vmatpush2.msra.mxu0 0.0
    %295 = vmatprep.subr.mxu0 0.0
    %296 = vmatpush2.msra.mxu0 0.0
    %297 = vmatprep.subr.mxu0 0.0
    %298 = vmatpush2.msra.mxu0 0.0
    %299 = vmatprep.subr.mxu0 0.0
    %300 = vmatpush2.msra.mxu0 0.0
    %301 = vmatprep.mubr.f32.mxu0 0.0
    %302 = vmatmul.mubr.f32.gmra.mxu0 %v232
    %v303 = vpop.f32.mrf.mxu0
    %v304 = vadd.f32 %v230, %v303
    %v305 = vpop.f32.mrf.mxu0
    %306 = vmatprep.mubr.f32.mxu0 0.0
    %307 = vmatmul.mubr.f32.gmra.mxu0 %v235
    %v308 = vpop.f32.mrf.mxu0
    %v309 = vadd.f32 %v230, %v308
    %v310 = vpop.f32.mrf.mxu0
    %311 = vdwg.mxu0
    %v312 = vld [vmem:[%s1] sm:$0x1]
    %v313 = vld [vmem:[%s1 + $0x1] sm:$0x1]
    %v314 = vsub.f32 1.0, %v312
    %v315 = vsub.f32 1.0, %v313
    %v316 = vmul.f32 %v314, -1e+09
    %v317 = vmul.f32 %v315, -1e+09
    %v320 = vlaneseq
    %v321 = vshrl.u32 %v320, 7
    %v322 = vsub.s32 0, %v321
    %v323 = vrot.slane %v316, %v322
    %v324 = vlaneseq
    %v325 = vshrl.u32 %v324, 7
    %v326 = vsub.s32 0, %v325
    %v327 = vrot.slane %v317, %v326
    %331 = vrot.lane.b32.xlu0 %v304, 96
    %v332 = vpop.permute.xlu0 %331
    %v333 = vsel %vm186, %v304, 0
    %v335 = vsel %vm186, %v332, 0
    %337 = vmatprep.subr.mxu0 0.0
    %338 = vmatpush1.xpose.msra.mxu0 0.0
    %339 = vmatprep.subr.mxu0 0.0
    %340 = vmatpush1.xpose.msra.mxu0 0.0
    %341 = vmatprep.subr.mxu0 0.0
    %342 = vmatpush1.xpose.msra.mxu0 0.0
    %343 = vmatprep.subr.mxu0 0.0
    %344 = vmatpush1.xpose.msra.mxu0 0.0
    %345 = vmatprep.subr.mxu0 0.0
    %346 = vmatpush1.xpose.msra.mxu0 0.0
    %347 = vmatprep.subr.mxu0 0.0
    %348 = vmatpush1.xpose.msra.mxu0 0.0
    %349 = vmatprep.subr.mxu0 0.0
    %350 = vmatpush1.xpose.msra.mxu0 0.0
    %351 = vmatprep.subr.mxu0 0.0
    %352 = vmatpush1.xpose.msra.mxu0 0.0
    %353 = vmatprep.subr.mxu0 0.0
    %354 = vmatpush1.xpose.msra.mxu0 0.0
    %355 = vmatprep.subr.mxu0 0.0
    %356 = vmatpush1.xpose.msra.mxu0 0.0
    %357 = vmatprep.subr.mxu0 0.0
    %358 = vmatpush1.xpose.msra.mxu0 0.0
    %359 = vmatprep.subr.mxu0 0.0
    %360 = vmatpush1.xpose.msra.mxu0 0.0
    %361 = vmatprep.subr.mxu0 0.0
    %362 = vmatpush1.xpose.msra.mxu0 0.0
    %363 = vmatprep.subr.mxu0 0.0
    %364 = vmatpush1.xpose.msra.mxu0 0.0
    %365 = vmatprep.subr.mxu0 0.0
    %366 = vmatpush1.xpose.msra.mxu0 0.0
    %367 = vmatprep.subr.mxu0 0.0
    %368 = vmatpush1.xpose.msra.mxu0 %v335
    %369 = vmatprep.subr.mxu0 0.0
    %370 = vmatpush2.xpose.msra.mxu0 0.0
    %371 = vmatprep.subr.mxu0 0.0
    %372 = vmatpush2.xpose.msra.mxu0 0.0
    %373 = vmatprep.subr.mxu0 0.0
    %374 = vmatpush2.xpose.msra.mxu0 0.0
    %375 = vmatprep.subr.mxu0 0.0
    %376 = vmatpush2.xpose.msra.mxu0 0.0
    %377 = vmatprep.subr.mxu0 0.0
    %378 = vmatpush2.xpose.msra.mxu0 0.0
    %379 = vmatprep.subr.mxu0 0.0
    %380 = vmatpush2.xpose.msra.mxu0 0.0
    %381 = vmatprep.subr.mxu0 0.0
    %382 = vmatpush2.xpose.msra.mxu0 0.0
    %383 = vmatprep.subr.mxu0 0.0
    %384 = vmatpush2.xpose.msra.mxu0 0.0
    %385 = vmatprep.subr.mxu0 0.0
    %386 = vmatpush2.xpose.msra.mxu0 0.0
    %387 = vmatprep.subr.mxu0 0.0
    %388 = vmatpush2.xpose.msra.mxu0 0.0
    %389 = vmatprep.subr.mxu0 0.0
    %390 = vmatpush2.xpose.msra.mxu0 0.0
    %391 = vmatprep.subr.mxu0 0.0
    %392 = vmatpush2.xpose.msra.mxu0 0.0
    %393 = vmatprep.subr.mxu0 0.0
    %394 = vmatpush2.xpose.msra.mxu0 0.0
    %395 = vmatprep.subr.mxu0 0.0
    %396 = vmatpush2.xpose.msra.mxu0 0.0
    %397 = vmatprep.subr.mxu0 0.0
    %398 = vmatpush2.xpose.msra.mxu0 0.0
    %399 = vmatprep.subr.mxu0 0.0
    %400 = vmatpush2.xpose.msra.mxu0 0.0
    %401 = vmatprep.mubr.f32.mxu0 0.0
    %402 = vmatmul.mubr.f32.gmra.mxu0 %v333
    %v403 = vpop.f32.mrf.mxu0
    %v404 = vadd.f32 %v323, %v403
    %v405 = vpop.f32.mrf.mxu0
    %406 = vdwg.mxu0
    %408 = vrot.lane.b32.xlu0 %v309, 96
    %v409 = vpop.permute.xlu0 %408
    %v410 = vsel %vm186, %v309, 0
    %v412 = vsel %vm186, %v409, 0
    %414 = vmatprep.subr.mxu0 0.0
    %415 = vmatpush1.xpose.msra.mxu0 0.0
    %416 = vmatprep.subr.mxu0 0.0
    %417 = vmatpush1.xpose.msra.mxu0 0.0
    %418 = vmatprep.subr.mxu0 0.0
    %419 = vmatpush1.xpose.msra.mxu0 0.0
    %420 = vmatprep.subr.mxu0 0.0
    %421 = vmatpush1.xpose.msra.mxu0 0.0
    %422 = vmatprep.subr.mxu0 0.0
    %423 = vmatpush1.xpose.msra.mxu0 0.0
    %424 = vmatprep.subr.mxu0 0.0
    %425 = vmatpush1.xpose.msra.mxu0 0.0
    %426 = vmatprep.subr.mxu0 0.0
    %427 = vmatpush1.xpose.msra.mxu0 0.0
    %428 = vmatprep.subr.mxu0 0.0
    %429 = vmatpush1.xpose.msra.mxu0 0.0
    %430 = vmatprep.subr.mxu0 0.0
    %431 = vmatpush1.xpose.msra.mxu0 0.0
    %432 = vmatprep.subr.mxu0 0.0
    %433 = vmatpush1.xpose.msra.mxu0 0.0
    %434 = vmatprep.subr.mxu0 0.0
    %435 = vmatpush1.xpose.msra.mxu0 0.0
    %436 = vmatprep.subr.mxu0 0.0
    %437 = vmatpush1.xpose.msra.mxu0 0.0
    %438 = vmatprep.subr.mxu0 0.0
    %439 = vmatpush1.xpose.msra.mxu0 0.0
    %440 = vmatprep.subr.mxu0 0.0
    %441 = vmatpush1.xpose.msra.mxu0 0.0
    %442 = vmatprep.subr.mxu0 0.0
    %443 = vmatpush1.xpose.msra.mxu0 0.0
    %444 = vmatprep.subr.mxu0 0.0
    %445 = vmatpush1.xpose.msra.mxu0 %v412
    %446 = vmatprep.subr.mxu0 0.0
    %447 = vmatpush2.xpose.msra.mxu0 0.0
    %448 = vmatprep.subr.mxu0 0.0
    %449 = vmatpush2.xpose.msra.mxu0 0.0
    %450 = vmatprep.subr.mxu0 0.0
    %451 = vmatpush2.xpose.msra.mxu0 0.0
    %452 = vmatprep.subr.mxu0 0.0
    %453 = vmatpush2.xpose.msra.mxu0 0.0
    %454 = vmatprep.subr.mxu0 0.0
    %455 = vmatpush2.xpose.msra.mxu0 0.0
    %456 = vmatprep.subr.mxu0 0.0
    %457 = vmatpush2.xpose.msra.mxu0 0.0
    %458 = vmatprep.subr.mxu0 0.0
    %459 = vmatpush2.xpose.msra.mxu0 0.0
    %460 = vmatprep.subr.mxu0 0.0
    %461 = vmatpush2.xpose.msra.mxu0 0.0
    %462 = vmatprep.subr.mxu0 0.0
    %463 = vmatpush2.xpose.msra.mxu0 0.0
    %464 = vmatprep.subr.mxu0 0.0
    %465 = vmatpush2.xpose.msra.mxu0 0.0
    %466 = vmatprep.subr.mxu0 0.0
    %467 = vmatpush2.xpose.msra.mxu0 0.0
    %468 = vmatprep.subr.mxu0 0.0
    %469 = vmatpush2.xpose.msra.mxu0 0.0
    %470 = vmatprep.subr.mxu0 0.0
    %471 = vmatpush2.xpose.msra.mxu0 0.0
    %472 = vmatprep.subr.mxu0 0.0
    %473 = vmatpush2.xpose.msra.mxu0 0.0
    %474 = vmatprep.subr.mxu0 0.0
    %475 = vmatpush2.xpose.msra.mxu0 0.0
    %476 = vmatprep.subr.mxu0 0.0
    %477 = vmatpush2.xpose.msra.mxu0 0.0
    %478 = vmatprep.mubr.f32.mxu0 0.0
    %479 = vmatmul.mubr.f32.gmra.mxu0 %v410
    %v480 = vpop.f32.mrf.mxu0
    %v481 = vadd.f32 %v327, %v480
    %v482 = vpop.f32.mrf.mxu0
    %483 = vdwg.mxu0
    %vm484 = vcmask 64512
    %v485 = vsel %vm484, %v404, -inf
    %486 = vmax.xlane.f32.xlu0 %v485
    %v487 = vpop.xlane.xlu0 %486
    %v488 = vsel %vm484, %v481, -inf
    %489 = vmax.xlane.f32.xlu0 %v488
    %v490 = vpop.xlane.xlu0 %489
    %v491 = vsub.f32 %v404, %v487
    %v492 = vsub.f32 %v481, %v490
    %v493 = vmul.f32 %v491, 1.442695
    %v494 = vpow.pop %v493
    %v495 = vmul.f32 %v492, 1.442695
    %v496 = vpow.pop %v495
    %v497 = vsel %vm484, %v494, 0.0
    %498 = vadd.xlane.f32.xlu0 %v497
    %v499 = vpop.xlane.xlu0 %498
    %v500 = vsel %vm484, %v496, 0.0
    %501 = vadd.xlane.f32.xlu0 %v500
    %v502 = vpop.xlane.xlu0 %501
    %v503 = vrcp.pop %v499
    %v504 = vrcp.pop %v502
    %v505 = vmul.f32 %v494, %v503
    %v506 = vmul.f32 %v496, %v504
    %507 = vrot.lane.b32.xlu0 %v304, 64
    %v508 = vpop.permute.xlu0 %507
    %v511 = vsel %vm484, %v505, 0
    %513 = vmatprep.subr.mxu0 0.0
    %514 = vmatpush1.msra.mxu0 0.0
    %515 = vmatprep.subr.mxu0 0.0
    %516 = vmatpush1.msra.mxu0 0.0
    %517 = vmatprep.subr.mxu0 0.0
    %518 = vmatpush1.msra.mxu0 0.0
    %519 = vmatprep.subr.mxu0 0.0
    %520 = vmatpush1.msra.mxu0 0.0
    %521 = vmatprep.subr.mxu0 0.0
    %522 = vmatpush1.msra.mxu0 0.0
    %523 = vmatprep.subr.mxu0 0.0
    %524 = vmatpush1.msra.mxu0 0.0
    %525 = vmatprep.subr.mxu0 0.0
    %526 = vmatpush1.msra.mxu0 0.0
    %527 = vmatprep.subr.mxu0 0.0
    %528 = vmatpush1.msra.mxu0 0.0
    %529 = vmatprep.subr.mxu0 0.0
    %530 = vmatpush1.msra.mxu0 0.0
    %531 = vmatprep.subr.mxu0 0.0
    %532 = vmatpush1.msra.mxu0 0.0
    %533 = vmatprep.subr.mxu0 0.0
    %534 = vmatpush1.msra.mxu0 0.0
    %535 = vmatprep.subr.mxu0 0.0
    %536 = vmatpush1.msra.mxu0 0.0
    %537 = vmatprep.subr.mxu0 0.0
    %538 = vmatpush1.msra.mxu0 0.0
    %539 = vmatprep.subr.mxu0 0.0
    %540 = vmatpush1.msra.mxu0 0.0
    %541 = vmatprep.subr.mxu0 0.0
    %542 = vmatpush1.msra.mxu0 0.0
    %543 = vmatprep.subr.mxu0 0.0
    %544 = vmatpush1.msra.mxu0 %v508
    %545 = vmatprep.subr.mxu0 0.0
    %546 = vmatpush2.msra.mxu0 0.0
    %547 = vmatprep.subr.mxu0 0.0
    %548 = vmatpush2.msra.mxu0 0.0
    %549 = vmatprep.subr.mxu0 0.0
    %550 = vmatpush2.msra.mxu0 0.0
    %551 = vmatprep.subr.mxu0 0.0
    %552 = vmatpush2.msra.mxu0 0.0
    %553 = vmatprep.subr.mxu0 0.0
    %554 = vmatpush2.msra.mxu0 0.0
    %555 = vmatprep.subr.mxu0 0.0
    %556 = vmatpush2.msra.mxu0 0.0
    %557 = vmatprep.subr.mxu0 0.0
    %558 = vmatpush2.msra.mxu0 0.0
    %559 = vmatprep.subr.mxu0 0.0
    %560 = vmatpush2.msra.mxu0 0.0
    %561 = vmatprep.subr.mxu0 0.0
    %562 = vmatpush2.msra.mxu0 0.0
    %563 = vmatprep.subr.mxu0 0.0
    %564 = vmatpush2.msra.mxu0 0.0
    %565 = vmatprep.subr.mxu0 0.0
    %566 = vmatpush2.msra.mxu0 0.0
    %567 = vmatprep.subr.mxu0 0.0
    %568 = vmatpush2.msra.mxu0 0.0
    %569 = vmatprep.subr.mxu0 0.0
    %570 = vmatpush2.msra.mxu0 0.0
    %571 = vmatprep.subr.mxu0 0.0
    %572 = vmatpush2.msra.mxu0 0.0
    %573 = vmatprep.subr.mxu0 0.0
    %574 = vmatpush2.msra.mxu0 0.0
    %575 = vmatprep.subr.mxu0 0.0
    %576 = vmatpush2.msra.mxu0 0.0
    %577 = vmatprep.mubr.f32.mxu0 0.0
    %578 = vmatmul.mubr.f32.gmra.mxu0 %v511
    %v579 = vpop.f32.mrf.mxu0
    %v580 = vadd.f32 0.0, %v579
    %v581 = vpop.f32.mrf.mxu0
    %582 = vdwg.mxu0
    %583 = vrot.lane.b32.xlu0 %v309, 64
    %v584 = vpop.permute.xlu0 %583
    %v587 = vsel %vm484, %v506, 0
    %589 = vmatprep.subr.mxu0 0.0
    %590 = vmatpush1.msra.mxu0 0.0
    %591 = vmatprep.subr.mxu0 0.0
    %592 = vmatpush1.msra.mxu0 0.0
    %593 = vmatprep.subr.mxu0 0.0
    %594 = vmatpush1.msra.mxu0 0.0
    %595 = vmatprep.subr.mxu0 0.0
    %596 = vmatpush1.msra.mxu0 0.0
    %597 = vmatprep.subr.mxu0 0.0
    %598 = vmatpush1.msra.mxu0 0.0
    %599 = vmatprep.subr.mxu0 0.0
    %600 = vmatpush1.msra.mxu0 0.0
    %601 = vmatprep.subr.mxu0 0.0
    %602 = vmatpush1.msra.mxu0 0.0
    %603 = vmatprep.subr.mxu0 0.0
    %604 = vmatpush1.msra.mxu0 0.0
    %605 = vmatprep.subr.mxu0 0.0
    %606 = vmatpush1.msra.mxu0 0.0
    %607 = vmatprep.subr.mxu0 0.0
    %608 = vmatpush1.msra.mxu0 0.0
    %609 = vmatprep.subr.mxu0 0.0
    %610 = vmatpush1.msra.mxu0 0.0
    %611 = vmatprep.subr.mxu0 0.0
    %612 = vmatpush1.msra.mxu0 0.0
    %613 = vmatprep.subr.mxu0 0.0
    %614 = vmatpush1.msra.mxu0 0.0
    %615 = vmatprep.subr.mxu0 0.0
    %616 = vmatpush1.msra.mxu0 0.0
    %617 = vmatprep.subr.mxu0 0.0
    %618 = vmatpush1.msra.mxu0 0.0
    %619 = vmatprep.subr.mxu0 0.0
    %620 = vmatpush1.msra.mxu0 %v584
    %621 = vmatprep.subr.mxu0 0.0
    %622 = vmatpush2.msra.mxu0 0.0
    %623 = vmatprep.subr.mxu0 0.0
    %624 = vmatpush2.msra.mxu0 0.0
    %625 = vmatprep.subr.mxu0 0.0
    %626 = vmatpush2.msra.mxu0 0.0
    %627 = vmatprep.subr.mxu0 0.0
    %628 = vmatpush2.msra.mxu0 0.0
    %629 = vmatprep.subr.mxu0 0.0
    %630 = vmatpush2.msra.mxu0 0.0
    %631 = vmatprep.subr.mxu0 0.0
    %632 = vmatpush2.msra.mxu0 0.0
    %633 = vmatprep.subr.mxu0 0.0
    %634 = vmatpush2.msra.mxu0 0.0
    %635 = vmatprep.subr.mxu0 0.0
    %636 = vmatpush2.msra.mxu0 0.0
    %637 = vmatprep.subr.mxu0 0.0
    %638 = vmatpush2.msra.mxu0 0.0
    %639 = vmatprep.subr.mxu0 0.0
    %640 = vmatpush2.msra.mxu0 0.0
    %641 = vmatprep.subr.mxu0 0.0
    %642 = vmatpush2.msra.mxu0 0.0
    %643 = vmatprep.subr.mxu0 0.0
    %644 = vmatpush2.msra.mxu0 0.0
    %645 = vmatprep.subr.mxu0 0.0
    %646 = vmatpush2.msra.mxu0 0.0
    %647 = vmatprep.subr.mxu0 0.0
    %648 = vmatpush2.msra.mxu0 0.0
    %649 = vmatprep.subr.mxu0 0.0
    %650 = vmatpush2.msra.mxu0 0.0
    %651 = vmatprep.subr.mxu0 0.0
    %652 = vmatpush2.msra.mxu0 0.0
    %653 = vmatprep.mubr.f32.mxu0 0.0
    %654 = vmatmul.mubr.f32.gmra.mxu0 %v587
    %v655 = vpop.f32.mrf.mxu0
    %v656 = vadd.f32 0.0, %v655
    %v657 = vpop.f32.mrf.mxu0
    %658 = vdwg.mxu0
    %v659 = vld [vmem:[#allocation5 + $0x3] sm:$0x1]
    %v660 = vlaneseq
    %v661 = vshrl.u32 %v660, 7
    %v662 = vsub.s32 0, %v661
    %v663 = vrot.slane %v659, %v662
    %v665 = vsel %vm186, %v580, 0
    %v668 = vsel %vm186, %v656, 0
    %670 = vmatprep.subr.mxu0 0.0
    %671 = vmatpush1.msra.mxu0 0.0
    %672 = vmatprep.subr.mxu0 0.0
    %673 = vmatpush1.msra.mxu0 0.0
    %674 = vmatprep.subr.mxu0 0.0
    %675 = vmatpush1.msra.mxu0 0.0
    %676 = vmatprep.subr.mxu0 0.0
    %677 = vmatpush1.msra.mxu0 0.0
    %678 = vmatprep.subr.mxu0 0.0
    %679 = vmatpush1.msra.mxu0 0.0
    %680 = vmatprep.subr.mxu0 0.0
    %681 = vmatpush1.msra.mxu0 0.0
    %682 = vmatprep.subr.mxu0 0.0
    %683 = vmatpush1.msra.mxu0 0.0
    %684 = vmatprep.subr.mxu0 0.0
    %685 = vmatpush1.msra.mxu0 0.0
    %686 = vmatprep.subr.mxu0 0.0
    %687 = vmatpush1.msra.mxu0 0.0
    %688 = vmatprep.subr.mxu0 0.0
    %689 = vmatpush1.msra.mxu0 0.0
    %690 = vmatprep.subr.mxu0 0.0
    %691 = vmatpush1.msra.mxu0 0.0
    %692 = vmatprep.subr.mxu0 0.0
    %693 = vmatpush1.msra.mxu0 0.0
    %694 = vmatprep.subr.mxu0 0.0
    %695 = vmatpush1.msra.mxu0 %v171
    %696 = vmatprep.subr.mxu0 0.0
    %697 = vmatpush1.msra.mxu0 %v170
    %698 = vmatprep.subr.mxu0 0.0
    %699 = vmatpush1.msra.mxu0 %v169
    %700 = vmatprep.subr.mxu0 0.0
    %701 = vmatpush1.msra.mxu0 %v168
    %702 = vmatprep.subr.mxu0 0.0
    %703 = vmatpush2.msra.mxu0 0.0
    %704 = vmatprep.subr.mxu0 0.0
    %705 = vmatpush2.msra.mxu0 0.0
    %706 = vmatprep.subr.mxu0 0.0
    %707 = vmatpush2.msra.mxu0 0.0
    %708 = vmatprep.subr.mxu0 0.0
    %709 = vmatpush2.msra.mxu0 0.0
    %710 = vmatprep.subr.mxu0 0.0
    %711 = vmatpush2.msra.mxu0 0.0
    %712 = vmatprep.subr.mxu0 0.0
    %713 = vmatpush2.msra.mxu0 0.0
    %714 = vmatprep.subr.mxu0 0.0
    %715 = vmatpush2.msra.mxu0 0.0
    %716 = vmatprep.subr.mxu0 0.0
    %717 = vmatpush2.msra.mxu0 0.0
    %718 = vmatprep.subr.mxu0 0.0
    %719 = vmatpush2.msra.mxu0 0.0
    %720 = vmatprep.subr.mxu0 0.0
    %721 = vmatpush2.msra.mxu0 0.0
    %722 = vmatprep.subr.mxu0 0.0
    %723 = vmatpush2.msra.mxu0 0.0
    %724 = vmatprep.subr.mxu0 0.0
    %725 = vmatpush2.msra.mxu0 0.0
    %726 = vmatprep.subr.mxu0 0.0
    %727 = vmatpush2.msra.mxu0 0.0
    %728 = vmatprep.subr.mxu0 0.0
    %729 = vmatpush2.msra.mxu0 0.0
    %730 = vmatprep.subr.mxu0 0.0
    %731 = vmatpush2.msra.mxu0 0.0
    %732 = vmatprep.subr.mxu0 0.0
    %733 = vmatpush2.msra.mxu0 0.0
    %734 = vmatprep.mubr.f32.mxu0 0.0
    %735 = vmatmul.mubr.f32.gmra.mxu0 %v665
    %v736 = vpop.f32.mrf.mxu0
    %v737 = vadd.f32 %v663, %v736
    %v738 = vpop.f32.mrf.mxu0
    %739 = vmatprep.mubr.f32.mxu0 0.0
    %740 = vmatmul.mubr.f32.gmra.mxu0 %v668
    %v741 = vpop.f32.mrf.mxu0
    %v742 = vadd.f32 %v663, %v741
    %v743 = vpop.f32.mrf.mxu0
    %744 = vdwg.mxu0
    %v745 = vadd.f32 %v224, %v737
    %v746 = vadd.f32 %v225, %v742
    %v747 = vld [vmem:[#allocation5 + $0x4] sm:$0x1]
    %v748 = vld [vmem:[#allocation5 + $0x5] sm:$0x1]
    %v749 = vsel %vm186, %v745, 0.0
    %750 = vadd.xlane.f32.xlu0 %v749
    %v751 = vpop.xlane.xlu0 %750
    %v752 = vsel %vm186, %v746, 0.0
    %753 = vadd.xlane.f32.xlu0 %v752
    %v754 = vpop.xlane.xlu0 %753
    %v755 = vmul.f32 %v751, %v193
    %v756 = vmul.f32 %v754, %v193
    %v757 = vsub.f32 %v745, %v755
    %v758 = vsub.f32 %v746, %v756
    %v759 = vmul.f32 %v757, %v757
    %v760 = vmul.f32 %v758, %v758
    %v761 = vsel %vm186, %v759, 0.0
    %762 = vadd.xlane.f32.xlu0 %v761
    %v763 = vpop.xlane.xlu0 %762
    %v764 = vsel %vm186, %v760, 0.0
    %765 = vadd.xlane.f32.xlu0 %v764
    %v766 = vpop.xlane.xlu0 %765
    %v767 = vmul.f32 %v763, %v193
    %v768 = vmul.f32 %v766, %v193
    %v769 = vadd.f32 %v767, 1e-12
    %v770 = vadd.f32 %v768, 1e-12
    %v771 = vrsqrt.pop %v769
    %v772 = vrsqrt.pop %v770
    %v773 = vmul.f32 %v757, %v771
    %v774 = vmul.f32 %v758, %v772
    %v775 = vlaneseq
    %v776 = vshrl.u32 %v775, 7
    %v777 = vsub.s32 0, %v776
    %v778 = vrot.slane %v747, %v777
    %v779 = vmul.f32 %v773, %v778
    %v780 = vmul.f32 %v774, %v778
    %v781 = vlaneseq
    %v782 = vshrl.u32 %v781, 7
    %v783 = vsub.s32 0, %v782
    %v784 = vrot.slane %v748, %v783
    %v785 = vadd.f32 %v779, %v784
    %v786 = vadd.f32 %v780, %v784
    %v787 = vld [vmem:[#allocation5 + $0x6] sm:$0x1]
    %v788 = vlaneseq
    %v789 = vshrl.u32 %v788, 7
    %v790 = vsub.s32 0, %v789
    %v791 = vrot.slane %v787, %v790
    %v793 = vsel %vm186, %v785, 0
    %v796 = vsel %vm186, %v786, 0
    %798 = vmatprep.subr.mxu0 0.0
    %799 = vmatpush1.msra.mxu0 0.0
    %800 = vmatprep.subr.mxu0 0.0
    %801 = vmatpush1.msra.mxu0 0.0
    %802 = vmatprep.subr.mxu0 0.0
    %803 = vmatpush1.msra.mxu0 0.0
    %804 = vmatprep.subr.mxu0 0.0
    %805 = vmatpush1.msra.mxu0 0.0
    %806 = vmatprep.subr.mxu0 0.0
    %807 = vmatpush1.msra.mxu0 0.0
    %808 = vmatprep.subr.mxu0 0.0
    %809 = vmatpush1.msra.mxu0 0.0
    %810 = vmatprep.subr.mxu0 0.0
    %811 = vmatpush1.msra.mxu0 0.0
    %812 = vmatprep.subr.mxu0 0.0
    %813 = vmatpush1.msra.mxu0 0.0
    %814 = vmatprep.subr.mxu0 0.0
    %815 = vmatpush1.msra.mxu0 0.0
    %816 = vmatprep.subr.mxu0 0.0
    %817 = vmatpush1.msra.mxu0 0.0
    %818 = vmatprep.subr.mxu0 0.0
    %819 = vmatpush1.msra.mxu0 0.0
    %820 = vmatprep.subr.mxu0 0.0
    %821 = vmatpush1.msra.mxu0 0.0
    %822 = vmatprep.subr.mxu0 0.0
    %823 = vmatpush1.msra.mxu0 %v175
    %824 = vmatprep.subr.mxu0 0.0
    %825 = vmatpush1.msra.mxu0 %v174
    %826 = vmatprep.subr.mxu0 0.0
    %827 = vmatpush1.msra.mxu0 %v173
    %828 = vmatprep.subr.mxu0 0.0
    %829 = vmatpush1.msra.mxu0 %v172
    %830 = vmatprep.subr.mxu0 0.0
    %831 = vmatpush2.msra.mxu0 0.0
    %832 = vmatprep.subr.mxu0 0.0
    %833 = vmatpush2.msra.mxu0 0.0
    %834 = vmatprep.subr.mxu0 0.0
    %835 = vmatpush2.msra.mxu0 0.0
    %836 = vmatprep.subr.mxu0 0.0
    %837 = vmatpush2.msra.mxu0 0.0
    %838 = vmatprep.subr.mxu0 0.0
    %839 = vmatpush2.msra.mxu0 0.0
    %840 = vmatprep.subr.mxu0 0.0
    %841 = vmatpush2.msra.mxu0 0.0
    %842 = vmatprep.subr.mxu0 0.0
    %843 = vmatpush2.msra.mxu0 0.0
    %844 = vmatprep.subr.mxu0 0.0
    %845 = vmatpush2.msra.mxu0 0.0
    %846 = vmatprep.subr.mxu0 0.0
    %847 = vmatpush2.msra.mxu0 0.0
    %848 = vmatprep.subr.mxu0 0.0
    %849 = vmatpush2.msra.mxu0 0.0
    %850 = vmatprep.subr.mxu0 0.0
    %851 = vmatpush2.msra.mxu0 0.0
    %852 = vmatprep.subr.mxu0 0.0
    %853 = vmatpush2.msra.mxu0 0.0
    %854 = vmatprep.subr.mxu0 0.0
    %855 = vmatpush2.msra.mxu0 0.0
    %856 = vmatprep.subr.mxu0 0.0
    %857 = vmatpush2.msra.mxu0 0.0
    %858 = vmatprep.subr.mxu0 0.0
    %859 = vmatpush2.msra.mxu0 0.0
    %860 = vmatprep.subr.mxu0 0.0
    %861 = vmatpush2.msra.mxu0 0.0
    %862 = vmatprep.mubr.f32.mxu0 0.0
    %863 = vmatmul.mubr.f32.gmra.mxu0 %v793
    %v864 = vpop.f32.mrf.mxu0
    %v865 = vadd.f32 %v791, %v864
    %v866 = vpop.f32.mrf.mxu0
    %867 = vmatprep.mubr.f32.mxu0 0.0
    %868 = vmatmul.mubr.f32.gmra.mxu0 %v796
    %v869 = vpop.f32.mrf.mxu0
    %v870 = vadd.f32 %v791, %v869
    %v871 = vpop.f32.mrf.mxu0
    %872 = vdwg.mxu0
    %v873 = vmul.f32 %v865, %v865
    %v874 = vmul.f32 %v870, %v870
    %v875 = vmul.f32 %v865, %v873
    %v876 = vmul.f32 %v870, %v874
    %v877 = vmul.f32 %v875, 0.044715
    %v878 = vmul.f32 %v876, 0.044715
    %v879 = vadd.f32 %v865, %v877
    %v880 = vadd.f32 %v870, %v878
    %v881 = vmul.f32 %v879, 0.7978846
    %v882 = vmul.f32 %v880, 0.7978846
    %v883 = vtanh.pop %v881
    %v884 = vtanh.pop %v882
    %v885 = vadd.f32 %v883, 1.0
    %v886 = vadd.f32 %v884, 1.0
    %v887 = vmul.f32 %v885, 0.5
    %v888 = vmul.f32 %v886, 0.5
    %v889 = vmul.f32 %v865, %v887
    %v890 = vmul.f32 %v870, %v888
    %v891 = vld [vmem:[#allocation2] sm:$0xff]
    %v892 = vld [vmem:[#allocation2 + $0x8] sm:$0xff]
    %v893 = vld [vmem:[#allocation2 + $0x10] sm:$0xff]
    %v894 = vld [vmem:[#allocation2 + $0x18] sm:$0xff]
    %v895 = vld [vmem:[#allocation2 + $0x20] sm:$0xff]
    %v896 = vld [vmem:[#allocation2 + $0x28] sm:$0xff]
    %v897 = vld [vmem:[#allocation2 + $0x30] sm:$0xff]
    %v898 = vld [vmem:[#allocation2 + $0x38] sm:$0xff]
    %v899 = vld [vmem:[#allocation2 + $0x40] sm:$0xff]
    %v900 = vld [vmem:[#allocation2 + $0x48] sm:$0xff]
    %v901 = vld [vmem:[#allocation2 + $0x50] sm:$0xff]
    %v902 = vld [vmem:[#allocation2 + $0x58] sm:$0xff]
    %v903 = vld [vmem:[#allocation2 + $0x60] sm:$0xff]
    %v904 = vld [vmem:[#allocation2 + $0x68] sm:$0xff]
    %v905 = vld [vmem:[#allocation2 + $0x70] sm:$0xff]
    %v906 = vld [vmem:[#allocation2 + $0x78] sm:$0xff]
    %v907 = vld [vmem:[#allocation5 + $0x7] sm:$0x1]
    %v908 = vlaneseq
    %v909 = vshrl.u32 %v908, 7
    %v910 = vsub.s32 0, %v909
    %v911 = vrot.slane %v907, %v910
    %912 = vmatprep.subr.mxu0 0.0
    %913 = vmatpush1.msra.mxu0 %v906
    %914 = vmatprep.subr.mxu0 0.0
    %915 = vmatpush1.msra.mxu0 %v905
    %916 = vmatprep.subr.mxu0 0.0
    %917 = vmatpush1.msra.mxu0 %v904
    %918 = vmatprep.subr.mxu0 0.0
    %919 = vmatpush1.msra.mxu0 %v903
    %920 = vmatprep.subr.mxu0 0.0
    %921 = vmatpush1.msra.mxu0 %v902
    %922 = vmatprep.subr.mxu0 0.0
    %923 = vmatpush1.msra.mxu0 %v901
    %924 = vmatprep.subr.mxu0 0.0
    %925 = vmatpush1.msra.mxu0 %v900
    %926 = vmatprep.subr.mxu0 0.0
    %927 = vmatpush1.msra.mxu0 %v899
    %928 = vmatprep.subr.mxu0 0.0
    %929 = vmatpush1.msra.mxu0 %v898
    %930 = vmatprep.subr.mxu0 0.0
    %931 = vmatpush1.msra.mxu0 %v897
    %932 = vmatprep.subr.mxu0 0.0
    %933 = vmatpush1.msra.mxu0 %v896
    %934 = vmatprep.subr.mxu0 0.0
    %935 = vmatpush1.msra.mxu0 %v895
    %936 = vmatprep.subr.mxu0 0.0
    %937 = vmatpush1.msra.mxu0 %v894
    %938 = vmatprep.subr.mxu0 0.0
    %939 = vmatpush1.msra.mxu0 %v893
    %940 = vmatprep.subr.mxu0 0.0
    %941 = vmatpush1.msra.mxu0 %v892
    %942 = vmatprep.subr.mxu0 0.0
    %943 = vmatpush1.msra.mxu0 %v891
    %944 = vmatprep.subr.mxu0 0.0
    %945 = vmatpush2.msra.mxu0 0.0
    %946 = vmatprep.subr.mxu0 0.0
    %947 = vmatpush2.msra.mxu0 0.0
    %948 = vmatprep.subr.mxu0 0.0
    %949 = vmatpush2.msra.mxu0 0.0
    %950 = vmatprep.subr.mxu0 0.0
    %951 = vmatpush2.msra.mxu0 0.0
    %952 = vmatprep.subr.mxu0 0.0
    %953 = vmatpush2.msra.mxu0 0.0
    %954 = vmatprep.subr.mxu0 0.0
    %955 = vmatpush2.msra.mxu0 0.0
    %956 = vmatprep.subr.mxu0 0.0
    %957 = vmatpush2.msra.mxu0 0.0
    %958 = vmatprep.subr.mxu0 0.0
    %959 = vmatpush2.msra.mxu0 0.0
    %960 = vmatprep.subr.mxu0 0.0
    %961 = vmatpush2.msra.mxu0 0.0
    %962 = vmatprep.subr.mxu0 0.0
    %963 = vmatpush2.msra.mxu0 0.0
    %964 = vmatprep.subr.mxu0 0.0
    %965 = vmatpush2.msra.mxu0 0.0
    %966 = vmatprep.subr.mxu0 0.0
    %967 = vmatpush2.msra.mxu0 0.0
    %968 = vmatprep.subr.mxu0 0.0
    %969 = vmatpush2.msra.mxu0 0.0
    %970 = vmatprep.subr.mxu0 0.0
    %971 = vmatpush2.msra.mxu0 0.0
    %972 = vmatprep.subr.mxu0 0.0
    %973 = vmatpush2.msra.mxu0 0.0
    %974 = vmatprep.subr.mxu0 0.0
    %975 = vmatpush2.msra.mxu0 0.0
    %976 = vmatprep.mubr.f32.mxu0 0.0
    %977 = vmatmul.mubr.f32.gmra.mxu0 %v889
    %v978 = vpop.f32.mrf.mxu0
    %v979 = vadd.f32 %v911, %v978
    %v980 = vpop.f32.mrf.mxu0
    %981 = vmatprep.mubr.f32.mxu0 0.0
    %982 = vmatmul.mubr.f32.gmra.mxu0 %v890
    %v983 = vpop.f32.mrf.mxu0
    %v984 = vadd.f32 %v911, %v983
    %v985 = vpop.f32.mrf.mxu0
    %986 = vdwg.mxu0
    %v987 = vadd.f32 %v785, %v979
    %v988 = vadd.f32 %v786, %v984
    %v989 = vld [vmem:[#allocation5 + $0x8] sm:$0x1]
    %v990 = vld [vmem:[#allocation5 + $0x9] sm:$0x1]
    %v991 = vsel %vm186, %v987, 0.0
    %992 = vadd.xlane.f32.xlu0 %v991
    %v993 = vpop.xlane.xlu0 %992
    %v994 = vsel %vm186, %v988, 0.0
    %995 = vadd.xlane.f32.xlu0 %v994
    %v996 = vpop.xlane.xlu0 %995
    %v997 = vmul.f32 %v993, %v193
    %v998 = vmul.f32 %v996, %v193
    %v999 = vsub.f32 %v987, %v997
    %v1000 = vsub.f32 %v988, %v998
    %v1001 = vmul.f32 %v999, %v999
    %v1002 = vmul.f32 %v1000, %v1000
    %v1003 = vsel %vm186, %v1001, 0.0
    %1004 = vadd.xlane.f32.xlu0 %v1003
    %v1005 = vpop.xlane.xlu0 %1004
    %v1006 = vsel %vm186, %v1002, 0.0
    %1007 = vadd.xlane.f32.xlu0 %v1006
    %v1008 = vpop.xlane.xlu0 %1007
    %v1009 = vmul.f32 %v1005, %v193
    %v1010 = vmul.f32 %v1008, %v193
    %v1011 = vadd.f32 %v1009, 1e-12
    %v1012 = vadd.f32 %v1010, 1e-12
    %v1013 = vrsqrt.pop %v1011
    %v1014 = vrsqrt.pop %v1012
    %v1015 = vmul.f32 %v999, %v1013
    %v1016 = vmul.f32 %v1000, %v1014
    %v1017 = vlaneseq
    %v1018 = vshrl.u32 %v1017, 7
    %v1019 = vsub.s32 0, %v1018
    %v1020 = vrot.slane %v989, %v1019
    %v1021 = vmul.f32 %v1015, %v1020
    %v1022 = vmul.f32 %v1016, %v1020
    %v1023 = vlaneseq
    %v1024 = vshrl.u32 %v1023, 7
    %v1025 = vsub.s32 0, %v1024
    %v1026 = vrot.slane %v990, %v1025
    %v1027 = vadd.f32 %v1021, %v1026
    %v1028 = vadd.f32 %v1022, %v1026
    %v1029 = vld [vmem:[#allocation5 + $0xa] sm:$0x1]
    %v1030 = vlaneseq
    %v1031 = vshrl.u32 %v1030, 7
    %v1032 = vsub.s32 0, %v1031
    %v1033 = vrot.slane %v1029, %v1032
    %v1035 = vsel %vm186, %v1027, 0
    %v1038 = vsel %vm186, %v1028, 0
    %1040 = vmatprep.subr.mxu0 0.0
    %1041 = vmatpush1.msra.mxu0 0.0
    %1042 = vmatprep.subr.mxu0 0.0
    %1043 = vmatpush1.msra.mxu0 0.0
    %1044 = vmatprep.subr.mxu0 0.0
    %1045 = vmatpush1.msra.mxu0 0.0
    %1046 = vmatprep.subr.mxu0 0.0
    %1047 = vmatpush1.msra.mxu0 0.0
    %1048 = vmatprep.subr.mxu0 0.0
    %1049 = vmatpush1.msra.mxu0 0.0
    %1050 = vmatprep.subr.mxu0 0.0
    %1051 = vmatpush1.msra.mxu0 0.0
    %1052 = vmatprep.subr.mxu0 0.0
    %1053 = vmatpush1.msra.mxu0 0.0
    %1054 = vmatprep.subr.mxu0 0.0
    %1055 = vmatpush1.msra.mxu0 0.0
    %1056 = vmatprep.subr.mxu0 0.0
    %1057 = vmatpush1.msra.mxu0 0.0
    %1058 = vmatprep.subr.mxu0 0.0
    %1059 = vmatpush1.msra.mxu0 0.0
    %1060 = vmatprep.subr.mxu0 0.0
    %1061 = vmatpush1.msra.mxu0 0.0
    %1062 = vmatprep.subr.mxu0 0.0
    %1063 = vmatpush1.msra.mxu0 0.0
    %1064 = vmatprep.subr.mxu0 0.0
    %1065 = vmatpush1.msra.mxu0 %v179
    %1066 = vmatprep.subr.mxu0 0.0
    %1067 = vmatpush1.msra.mxu0 %v178
    %1068 = vmatprep.subr.mxu0 0.0
    %1069 = vmatpush1.msra.mxu0 %v177
    %1070 = vmatprep.subr.mxu0 0.0
    %1071 = vmatpush1.msra.mxu0 %v176
    %1072 = vmatprep.subr.mxu0 0.0
    %1073 = vmatpush2.msra.mxu0 0.0
    %1074 = vmatprep.subr.mxu0 0.0
    %1075 = vmatpush2.msra.mxu0 0.0
    %1076 = vmatprep.subr.mxu0 0.0
    %1077 = vmatpush2.msra.mxu0 0.0
    %1078 = vmatprep.subr.mxu0 0.0
    %1079 = vmatpush2.msra.mxu0 0.0
    %1080 = vmatprep.subr.mxu0 0.0
    %1081 = vmatpush2.msra.mxu0 0.0
    %1082 = vmatprep.subr.mxu0 0.0
    %1083 = vmatpush2.msra.mxu0 0.0
    %1084 = vmatprep.subr.mxu0 0.0
    %1085 = vmatpush2.msra.mxu0 0.0
    %1086 = vmatprep.subr.mxu0 0.0
    %1087 = vmatpush2.msra.mxu0 0.0
    %1088 = vmatprep.subr.mxu0 0.0
    %1089 = vmatpush2.msra.mxu0 0.0
    %1090 = vmatprep.subr.mxu0 0.0
    %1091 = vmatpush2.msra.mxu0 0.0
    %1092 = vmatprep.subr.mxu0 0.0
    %1093 = vmatpush2.msra.mxu0 0.0
    %1094 = vmatprep.subr.mxu0 0.0
    %1095 = vmatpush2.msra.mxu0 0.0
    %1096 = vmatprep.subr.mxu0 0.0
    %1097 = vmatpush2.msra.mxu0 0.0
    %1098 = vmatprep.subr.mxu0 0.0
    %1099 = vmatpush2.msra.mxu0 0.0
    %1100 = vmatprep.subr.mxu0 0.0
    %1101 = vmatpush2.msra.mxu0 0.0
    %1102 = vmatprep.subr.mxu0 0.0
    %1103 = vmatpush2.msra.mxu0 0.0
    %1104 = vmatprep.mubr.f32.mxu0 0.0
    %1105 = vmatmul.mubr.f32.gmra.mxu0 %v1035
    %v1106 = vpop.f32.mrf.mxu0
    %v1107 = vadd.f32 %v1033, %v1106
    %v1108 = vpop.f32.mrf.mxu0
    %1109 = vmatprep.mubr.f32.mxu0 0.0
    %1110 = vmatmul.mubr.f32.gmra.mxu0 %v1038
    %v1111 = vpop.f32.mrf.mxu0
    %v1112 = vadd.f32 %v1033, %v1111
    %v1113 = vpop.f32.mrf.mxu0
    %1114 = vdwg.mxu0
    %v1115 = vtanh.pop %v1107
    %v1116 = vtanh.pop %v1112
    %v1117 = vld [vmem:[#allocation5 + $0xb] sm:$0x1]
    %v1118 = vlaneseq
    %v1119 = vshrl.u32 %v1118, 7
    %v1120 = vsub.s32 0, %v1119
    %v1121 = vrot.slane %v1117, %v1120
    %v1123 = vsel %vm186, %v1115, 0
    %v1126 = vsel %vm186, %v1116, 0
    %1128 = vmatprep.subr.mxu0 0.0
    %1129 = vmatpush1.msra.mxu0 0.0
    %1130 = vmatprep.subr.mxu0 0.0
    %1131 = vmatpush1.msra.mxu0 0.0
    %1132 = vmatprep.subr.mxu0 0.0
    %1133 = vmatpush1.msra.mxu0 0.0
    %1134 = vmatprep.subr.mxu0 0.0
    %1135 = vmatpush1.msra.mxu0 0.0
    %1136 = vmatprep.subr.mxu0 0.0
    %1137 = vmatpush1.msra.mxu0 0.0
    %1138 = vmatprep.subr.mxu0 0.0
    %1139 = vmatpush1.msra.mxu0 0.0
    %1140 = vmatprep.subr.mxu0 0.0
    %1141 = vmatpush1.msra.mxu0 0.0
    %1142 = vmatprep.subr.mxu0 0.0
    %1143 = vmatpush1.msra.mxu0 0.0
    %1144 = vmatprep.subr.mxu0 0.0
    %1145 = vmatpush1.msra.mxu0 0.0
    %1146 = vmatprep.subr.mxu0 0.0
    %1147 = vmatpush1.msra.mxu0 0.0
    %1148 = vmatprep.subr.mxu0 0.0
    %1149 = vmatpush1.msra.mxu0 0.0
    %1150 = vmatprep.subr.mxu0 0.0
    %1151 = vmatpush1.msra.mxu0 0.0
    %1152 = vmatprep.subr.mxu0 0.0
    %1153 = vmatpush1.msra.mxu0 %v183
    %1154 = vmatprep.subr.mxu0 0.0
    %1155 = vmatpush1.msra.mxu0 %v182
    %1156 = vmatprep.subr.mxu0 0.0
    %1157 = vmatpush1.msra.mxu0 %v181
    %1158 = vmatprep.subr.mxu0 0.0
    %1159 = vmatpush1.msra.mxu0 %v180
    %1160 = vmatprep.subr.mxu0 0.0
    %1161 = vmatpush2.msra.mxu0 0.0
    %1162 = vmatprep.subr.mxu0 0.0
    %1163 = vmatpush2.msra.mxu0 0.0
    %1164 = vmatprep.subr.mxu0 0.0
    %1165 = vmatpush2.msra.mxu0 0.0
    %1166 = vmatprep.subr.mxu0 0.0
    %1167 = vmatpush2.msra.mxu0 0.0
    %1168 = vmatprep.subr.mxu0 0.0
    %1169 = vmatpush2.msra.mxu0 0.0
    %1170 = vmatprep.subr.mxu0 0.0
    %1171 = vmatpush2.msra.mxu0 0.0
    %1172 = vmatprep.subr.mxu0 0.0
    %1173 = vmatpush2.msra.mxu0 0.0
    %1174 = vmatprep.subr.mxu0 0.0
    %1175 = vmatpush2.msra.mxu0 0.0
    %1176 = vmatprep.subr.mxu0 0.0
    %1177 = vmatpush2.msra.mxu0 0.0
    %1178 = vmatprep.subr.mxu0 0.0
    %1179 = vmatpush2.msra.mxu0 0.0
    %1180 = vmatprep.subr.mxu0 0.0
    %1181 = vmatpush2.msra.mxu0 0.0
    %1182 = vmatprep.subr.mxu0 0.0
    %1183 = vmatpush2.msra.mxu0 0.0
    %1184 = vmatprep.subr.mxu0 0.0
    %1185 = vmatpush2.msra.mxu0 0.0
    %1186 = vmatprep.subr.mxu0 0.0
    %1187 = vmatpush2.msra.mxu0 0.0
    %1188 = vmatprep.subr.mxu0 0.0
    %1189 = vmatpush2.msra.mxu0 0.0
    %1190 = vmatprep.subr.mxu0 0.0
    %1191 = vmatpush2.msra.mxu0 0.0
    %1192 = vmatprep.mubr.f32.mxu0 0.0
    %1193 = vmatmul.mubr.f32.gmra.mxu0 %v1123
    %v1194 = vpop.f32.mrf.mxu0
    %v1195 = vadd.f32 %v1121, %v1194
    %v1196 = vpop.f32.mrf.mxu0
    %1197 = vmatprep.mubr.f32.mxu0 0.0
    %1198 = vmatmul.mubr.f32.gmra.mxu0 %v1126
    %v1199 = vpop.f32.mrf.mxu0
    %v1200 = vadd.f32 %v1121, %v1199
    %v1201 = vpop.f32.mrf.mxu0
    %1202 = vdwg.mxu0
    %1203 = vst [vmem:[#allocation7] sm:$0xff] %v1195
    %1204 = vst [vmem:[#allocation7 + $0x8] sm:$0xff] %v1200
    // Predicated region
    $region38: #{tpu_custom_call.1} parent=1 // pred_check
      _
    $region39: #{tpu_custom_call.1} parent=1 // pred_check_branch
      %1206 = sbr.rel (0) target = $region41
    $region40: #{tpu_custom_call.1} parent=1 // pred_region
      %s1208 = ssub.s32 256, 256
      %1209 = vsyncadd [#allocation4], %s1208
      %s1210 = sshll.u32 [#allocation7], 4
      %s1211 = int_to_ptr.vmem [resolvable:$true] %s1210
      %1216 = dma.vmem_to_hbm [thread:$0]  %s1211, 256, %s7, [#allocation4], 128, 128, 8
    $region41: #{tpu_custom_call.1} parent=1 // pred_fallthru
      _
    // Predicated region
    $region42: #{tpu_custom_call.1} parent=1 // pred_check
      _
    $region43: #{tpu_custom_call.1} parent=1 // pred_check_branch
      %1218 = sbr.rel (0) target = $region45
    $region44: #{tpu_custom_call.1} parent=1 // pred_region
      %1219 = dma.done [#allocation4], 256
    $region45: #{tpu_custom_call.1} parent=1 // pred_fallthru
      _
    %1220 = vsyncpa [#allocation3], 1
    %1221 = vsyncpa [#allocation6], 1
    %1222 = vsyncpa [#allocation4], 1

</llo_original>
